<compile_context>
chip_gen: v7x
topology: tpu7x:2x2x1
jax: 0.10.0
libtpu: 0.0.40
codegen_flags: <defaults>
</compile_context>

<pallas_src>
import functools

import jax
import jax.numpy as jnp
from jax.experimental import pallas as pl
from jax.experimental.pallas import tpu as pltpu


def _tanh_sigmoid(x):
    # sigmoid(x) = 0.5 * (tanh(0.5 * x) + 1): one EUP push instead of exp+recip.
    return 0.5 * (jnp.tanh(0.5 * x) + 1.0)


def _malstm_kernel(x_ref, wih_ref, whh_ref, b_ref, out_ref,
                   gx_ref, h_ref, c_ref, *, chunk_steps, batch, unroll):
    """One time-chunk of the fused-branch MaLSTM recurrence.

    x_ref   : (CHUNK*2B, E)  bf16  time-major stacked embeddings, row = t*2B + b
                                   (b in [0,B) = branch 1, b in [B,2B) = branch 2)
    wih_ref : (E, 4H)        bf16  W_ih^T, PyTorch gate order i, f, g, o
    whh_ref : (H, 4H)        bf16  W_hh^T
    b_ref   : (1, 4H)        f32   b_ih + b_hh
    out_ref : (1, B)         f32   exp(-Manhattan distance), lane-dense
    gx_ref  : (CHUNK*2B,4H)  bf16  scratch: precomputed input projection (chunk)
    h_ref   : (2B, H)        f32   scratch: hidden state, carried across chunks
    c_ref   : (2B, H)        f32   scratch: cell state, carried across chunks
    """
    b2 = 2 * batch
    hidden = whh_ref.shape[0]

    # ---- First chunk: zero-init the recurrent state (matches LSTM(x, None)) ----
    @pl.when(pl.program_id(0) == 0)
    def _():
        h_ref[...] = jnp.zeros_like(h_ref)
        c_ref[...] = jnp.zeros_like(c_ref)

    # ---- Chunk prologue: ONE MXU matmul for all steps of this chunk ----
    # Stored in bf16 (halves scratch + per-step vld); bias is added per step in f32.
    gx_ref[...] = jnp.dot(
        x_ref[...], wih_ref[...],
        preferred_element_type=jnp.float32).astype(jnp.bfloat16)

    bias = b_ref[...]  # hoisted out of the loop (one vld, broadcast add per step)

    # ---- Serial recurrence: one (2B,H)@(H,4H) bf16 matmul per step ----
    def step(t, carry):
        h, c = carry
        row0 = pl.multiple_of(t * b2, b2)      # sublane-aligned gate-slab load
        gates = (gx_ref[pl.ds(row0, b2), :].astype(jnp.float32)
                 + bias
                 + jnp.dot(h.astype(jnp.bfloat16), whh_ref[...],
                           preferred_element_type=jnp.float32))
        # With H a multiple of 128 these slices are lane-aligned (no XLU shuffles).
        i = _tanh_sigmoid(gates[:, 0 * hidden:1 * hidden])
        f = _tanh_sigmoid(gates[:, 1 * hidden:2 * hidden])
        g = jnp.tanh(gates[:, 2 * hidden:3 * hidden])
        o = _tanh_sigmoid(gates[:, 3 * hidden:4 * hidden])
        c = f * c + i * g                      # state update kept in f32
        h = o * jnp.tanh(c)
        return (h, c)

    h, c = jax.lax.fori_loop(0, chunk_steps, step,
                             (h_ref[...], c_ref[...]), unroll=unroll)
    h_ref[...] = h
    c_ref[...] = c

    # ---- Last chunk: Manhattan similarity on the final hidden states ----
    @pl.when(pl.program_id(0) == pl.num_programs(0) - 1)
    def _():
        d = jnp.sum(jnp.abs(h[:batch] - h[batch:]), axis=1)     # (B,)
        out_ref[...] = jnp.exp(-d).reshape(1, batch)            # lane-dense (1,B)


def _pick_chunk(seq_len, max_chunk=16):
    """Largest divisor of seq_len that is <= max_chunk (keeps the grid exact)."""
    for c in range(min(seq_len, max_chunk), 0, -1):
        if seq_len % c == 0:
            return c
    return seq_len


@jax.jit
def malstm_forward(x1_ids, x2_ids, embedding, w_ih, w_hh, b_ih, b_hh):
    """x1_ids, x2_ids: int32 (B, T) token ids. Returns (B, 1) float32."""
    B, T = x1_ids.shape
    E = embedding.shape[1]
    H = w_hh.shape[1]

    chunk = _pick_chunk(T)
    num_chunks = T // chunk
    unroll = min(chunk, 8)          # bounded unroll: scheduler visibility w/o spills

    # ----- glue: branch fusion + embedding gather directly in time-major -----
    # NOTE: jnp.take clamps out-of-range ids (PyTorch Embedding would raise);
    # callers must pass ids in [0, maxwords].
    ids = jnp.concatenate([x1_ids, x2_ids], axis=0)          # (2B, T)
    ids_tm = jnp.transpose(ids)                              # (T, 2B)  (tiny ints)
    x_tm = jnp.take(embedding, ids_tm, axis=0)               # (T, 2B, E) time-major
    x2d = x_tm.reshape(T * 2 * B, E).astype(jnp.bfloat16)    # row = t*2B + b

    wih_t = jnp.transpose(w_ih).astype(jnp.bfloat16)         # (E, 4H)
    whh_t = jnp.transpose(w_hh).astype(jnp.bfloat16)         # (H, 4H)
    bias = (b_ih + b_hh).reshape(1, 4 * H).astype(jnp.float32)

    kernel = functools.partial(_malstm_kernel, chunk_steps=chunk, batch=B,
                               unroll=unroll)

    grid_spec = pltpu.PrefetchScalarGridSpec(
        num_scalar_prefetch=0,
        grid=(num_chunks,),          # time-chunked; x DMA pipelined across chunks
        in_specs=[
            pl.BlockSpec((chunk * 2 * B, E), lambda c: (c, 0)),   # embeddings (chunk)
            pl.BlockSpec((E, 4 * H), lambda c: (0, 0)),           # W_ih^T
            pl.BlockSpec((H, 4 * H), lambda c: (0, 0)),           # W_hh^T
            pl.BlockSpec((1, 4 * H), lambda c: (0, 0)),           # bias
        ],
        out_specs=pl.BlockSpec((1, B), lambda c: (0, 0)),         # lane-dense out
        scratch_shapes=[
            pltpu.VMEM((chunk * 2 * B, 4 * H), jnp.bfloat16),     # gx (this chunk)
            pltpu.VMEM((2 * B, H), jnp.float32),                  # h state
            pltpu.VMEM((2 * B, H), jnp.float32),                  # c state
        ],
    )

    out_1b = pl.pallas_call(
        kernel,
        out_shape=jax.ShapeDtypeStruct((1, B), jnp.float32),
        grid_spec=grid_spec,
        compiler_params=pltpu.CompilerParams(
            dimension_semantics=("arbitrary",),     # serial time dependence
            vmem_limit_bytes=32 * 1024 * 1024,      # safe on v5e/v6e/v7x
        ),
    )(x2d, wih_t, whh_t, bias)

    return jnp.transpose(out_1b)                    # (B, 1), matches PyTorch


def _reference_forward_f32(x1_ids, x2_ids, embedding, w_ih, w_hh, b_ih, b_hh):
    """Pure-JAX f32 reference mirroring torch.nn.LSTM (gate order i, f, g, o)."""
    H = w_hh.shape[1]

    def run(ids):
        x = jnp.take(embedding, ids, axis=0)            # (B, T, E)
        B = x.shape[0]
        h = jnp.zeros((B, H), jnp.float32)
        c = jnp.zeros((B, H), jnp.float32)

        def step(carry, xt):
            h, c = carry
            gates = xt @ w_ih.T + h @ w_hh.T + b_ih + b_hh
            i = jax.nn.sigmoid(gates[:, 0 * H:1 * H])
            f = jax.nn.sigmoid(gates[:, 1 * H:2 * H])
            g = jnp.tanh(gates[:, 2 * H:3 * H])
            o = jax.nn.sigmoid(gates[:, 3 * H:4 * H])
            c = f * c + i * g
            h = o * jnp.tanh(c)
            return (h, c), None

        (h, _), _ = jax.lax.scan(step, (h, c), jnp.transpose(x, (1, 0, 2)))
        return h

    h1 = run(x1_ids)
    h2 = run(x2_ids)
    return jnp.exp(-jnp.sum(jnp.abs(h1 - h2), axis=1, keepdims=True))


def _reference_forward_bf16_matched(x1_ids, x2_ids, embedding, w_ih, w_hh,
                                    b_ih, b_hh):
    """Reference with the SAME numerics as the kernel (bf16 MXU operands, bf16 gx,
    f32 accumulation/state, tanh-form sigmoids) -> allows a tight tolerance."""
    H = w_hh.shape[1]
    wih_t = jnp.transpose(w_ih).astype(jnp.bfloat16)
    whh_t = jnp.transpose(w_hh).astype(jnp.bfloat16)
    bias = (b_ih + b_hh).astype(jnp.float32)

    def run(ids):
        x = jnp.take(embedding, ids, axis=0).astype(jnp.bfloat16)   # (B, T, E)
        gx = jnp.einsum('bte,eg->btg', x, wih_t,
                        preferred_element_type=jnp.float32).astype(jnp.bfloat16)
        B = x.shape[0]
        h = jnp.zeros((B, H), jnp.float32)
        c = jnp.zeros((B, H), jnp.float32)

        def step(carry, gxt):
            h, c = carry
            gates = (gxt.astype(jnp.float32) + bias
                     + jnp.dot(h.astype(jnp.bfloat16), whh_t,
                               preferred_element_type=jnp.float32))
            i = _tanh_sigmoid(gates[:, 0 * H:1 * H])
            f = _tanh_sigmoid(gates[:, 1 * H:2 * H])
            g = jnp.tanh(gates[:, 2 * H:3 * H])
            o = _tanh_sigmoid(gates[:, 3 * H:4 * H])
            c = f * c + i * g
            h = o * jnp.tanh(c)
            return (h, c), None

        (h, _), _ = jax.lax.scan(step, (h, c), jnp.transpose(gx, (1, 0, 2)))
        return h

    h1 = run(x1_ids)
    h2 = run(x2_ids)
    return jnp.exp(-jnp.sum(jnp.abs(h1 - h2), axis=1, keepdims=True))


if __name__ == "__main__":
    # Small, TPU-friendly shapes consistent with the module's forward.
    # H is a multiple of 128 so each LSTM gate occupies a full lane span.
    B, T = 8, 8          # batch, sequence length
    E, H = 32, 128       # embed_dim, hidden_dim
    MAXWORDS = 64

    key = jax.random.PRNGKey(0)
    k_emb, k_wih, k_whh, k_bih, k_bhh, k_x1, k_x2 = jax.random.split(key, 7)

    # Deterministic parameter init (shapes match nn.Embedding / nn.LSTM).
    embedding = 0.5 * jax.random.normal(k_emb, (MAXWORDS + 1, E), jnp.float32)
    bound = 1.0 / jnp.sqrt(H)
    w_ih = jax.random.uniform(k_wih, (4 * H, E), jnp.float32, -bound, bound)
    w_hh = jax.random.uniform(k_whh, (4 * H, H), jnp.float32, -bound, bound)
    b_ih = jax.random.uniform(k_bih, (4 * H,), jnp.float32, -bound, bound)
    b_hh = jax.random.uniform(k_bhh, (4 * H,), jnp.float32, -bound, bound)

    x1_ids = jax.random.randint(k_x1, (B, T), 0, MAXWORDS + 1, jnp.int32)
    x2_ids = jax.random.randint(k_x2, (B, T), 0, MAXWORDS + 1, jnp.int32)
    # jnp.take clamps silently; make the range assumption explicit for the test.
    assert int(jnp.max(x1_ids)) <= MAXWORDS and int(jnp.max(x2_ids)) <= MAXWORDS

    out = malstm_forward(x1_ids, x2_ids, embedding, w_ih, w_hh, b_ih, b_hh)
    out = jax.block_until_ready(out)
    assert out.shape == (B, 1)
    assert bool(jnp.all(jnp.isfinite(out)))

    # --- Tight check: bf16-numerics-matched reference (same rounding points) ---
    ref_m = _reference_forward_bf16_matched(
        x1_ids, x2_ids, embedding, w_ih, w_hh, b_ih, b_hh)
    d_kernel = -jnp.log(jnp.maximum(out, 1e-30))
    d_match = -jnp.log(jnp.maximum(ref_m, 1e-30))
    assert jnp.allclose(d_kernel, d_match, atol=2e-2, rtol=1e-3), (
        "kernel vs bf16-matched reference mismatch")
    assert jnp.allclose(out, ref_m, rtol=2e-2, atol=1e-5)

    # --- Loose sanity check: full-f32 reference (bf16 drift accumulates) ---
    ref_f32 = _reference_forward_f32(
        x1_ids, x2_ids, embedding, w_ih, w_hh, b_ih, b_hh)
    d_ref = -jnp.log(jnp.maximum(ref_f32, 1e-30))
    assert jnp.allclose(d_kernel, d_ref, atol=0.5, rtol=1e-2)

    print("KERNEL_OK")
</pallas_src>

<mosaic_0001>
module attributes {stable_mosaic.version = 11 : i64} {
  func.func @_malstm_kernel(%arg0: i32, %arg1: memref<128x32xbf16, #tpu.memory_space<vmem>>, %arg2: memref<32x512xbf16, #tpu.memory_space<vmem>>, %arg3: memref<128x512xbf16, #tpu.memory_space<vmem>>, %arg4: memref<1x512xf32, #tpu.memory_space<vmem>>, %arg5: memref<1x8xf32, #tpu.memory_space<vmem>>, %arg6: memref<128x512xbf16, #tpu.memory_space<vmem>>, %arg7: memref<16x128xf32, #tpu.memory_space<vmem>>, %arg8: memref<16x128xf32, #tpu.memory_space<vmem>>) attributes {dimension_semantics = [#tpu.dimension_semantics<arbitrary>], iteration_bounds = array<i64: 1>, scalar_prefetch = 0 : i64, scratch_operands = 3 : i64, tpu.core_type = #tpu.core_type<tc>, window_params = [{transform_indices = @transform_0, window_bounds = array<i64: 128, 32>}, {pipeline_mode = #tpu.pipeline_mode<synchronous>, transform_indices = @transform_1, window_bounds = array<i64: 32, 512>}, {pipeline_mode = #tpu.pipeline_mode<synchronous>, transform_indices = @transform_2, window_bounds = array<i64: 128, 512>}, {pipeline_mode = #tpu.pipeline_mode<synchronous>, transform_indices = @transform_3, window_bounds = array<i64: 1, 512>}, {pipeline_mode = #tpu.pipeline_mode<synchronous>, transform_indices = @transform_4, window_bounds = array<i64: 1, 8>}]} {
    %c0_i32 = arith.constant 0 : i32
    %0 = arith.cmpi eq, %arg0, %c0_i32 : i32
    %1 = arith.extui %0 : i1 to i32
    %c0_i32_0 = arith.constant 0 : i32
    %2 = arith.cmpi ne, %1, %c0_i32_0 : i32
    scf.if %2 {
      %cst_130 = arith.constant 0.000000e+00 : f32
      %352 = vector.broadcast %cst_130 : f32 to vector<16x128xf32>
      %c0_131 = arith.constant 0 : index
      %c0_132 = arith.constant 0 : index
      %353 = vector.load %arg7[%c0_131, %c0_132] : memref<16x128xf32, #tpu.memory_space<vmem>>, vector<16x128xf32>
      tpu.vector_store %arg7[%c0_131, %c0_132], %352 {strides = array<i32>} : memref<16x128xf32, #tpu.memory_space<vmem>>, vector<16x128xf32>,
      %cst_133 = arith.constant 0.000000e+00 : f32
      %354 = vector.broadcast %cst_133 : f32 to vector<16x128xf32>
      %c0_134 = arith.constant 0 : index
      %c0_135 = arith.constant 0 : index
      %355 = vector.load %arg8[%c0_134, %c0_135] : memref<16x128xf32, #tpu.memory_space<vmem>>, vector<16x128xf32>
      tpu.vector_store %arg8[%c0_134, %c0_135], %354 {strides = array<i32>} : memref<16x128xf32, #tpu.memory_space<vmem>>, vector<16x128xf32>,
    } else {
    }
    %c0 = arith.constant 0 : index
    %c0_1 = arith.constant 0 : index
    %3 = vector.load %arg1[%c0, %c0_1] : memref<128x32xbf16, #tpu.memory_space<vmem>>, vector<128x32xbf16>
    %c0_2 = arith.constant 0 : index
    %c0_3 = arith.constant 0 : index
    %4 = vector.load %arg2[%c0_2, %c0_3] : memref<32x512xbf16, #tpu.memory_space<vmem>>, vector<32x512xbf16>
    %cst = arith.constant dense<0.000000e+00> : vector<128x512xf32>
    %5 = tpu.matmul %3, %4, %cst {dimension_numbers = #tpu.dot_dimension_numbers<[1], [0], [0], [1], [0, 0, 1, 1], [], []>} : vector<128x32xbf16>, vector<32x512xbf16>, vector<128x512xf32> -> vector<128x512xf32>
    %6 = arith.truncf %5 : vector<128x512xf32> to vector<128x512xbf16>
    %c0_4 = arith.constant 0 : index
    %c0_5 = arith.constant 0 : index
    %7 = vector.load %arg6[%c0_4, %c0_5] : memref<128x512xbf16, #tpu.memory_space<vmem>>, vector<128x512xbf16>
    tpu.vector_store %arg6[%c0_4, %c0_5], %6 {strides = array<i32>} : memref<128x512xbf16, #tpu.memory_space<vmem>>, vector<128x512xbf16>,
    %c0_6 = arith.constant 0 : index
    %c0_7 = arith.constant 0 : index
    %8 = vector.load %arg4[%c0_6, %c0_7] : memref<1x512xf32, #tpu.memory_space<vmem>>, vector<1x512xf32>
    %c0_8 = arith.constant 0 : index
    %c0_9 = arith.constant 0 : index
    %9 = vector.load %arg7[%c0_8, %c0_9] : memref<16x128xf32, #tpu.memory_space<vmem>>, vector<16x128xf32>
    %c0_10 = arith.constant 0 : index
    %c0_11 = arith.constant 0 : index
    %10 = vector.load %arg8[%c0_10, %c0_11] : memref<16x128xf32, #tpu.memory_space<vmem>>, vector<16x128xf32>
    %c0_i32_12 = arith.constant 0 : i32
    %c16_i32 = arith.constant 16 : i32
    %11 = arith.muli %c0_i32_12, %c16_i32 : i32
    %12 = tpu.assume_multiple %11, 16 : i32
    %13 = arith.index_cast %12 : i32 to index
    %c0_13 = arith.constant 0 : index
    %14 = vector.load %arg6[%13, %c0_13] : memref<128x512xbf16, #tpu.memory_space<vmem>>, vector<16x512xbf16>
    %15 = arith.extf %14 : vector<16x512xbf16> to vector<16x512xf32>
    %16 = vector.broadcast %8 : vector<1x512xf32> to vector<16x512xf32>
    %17 = arith.addf %15, %16 : vector<16x512xf32>
    %18 = arith.truncf %9 : vector<16x128xf32> to vector<16x128xbf16>
    %c0_14 = arith.constant 0 : index
    %c0_15 = arith.constant 0 : index
    %19 = vector.load %arg3[%c0_14, %c0_15] : memref<128x512xbf16, #tpu.memory_space<vmem>>, vector<128x512xbf16>
    %cst_16 = arith.constant dense<0.000000e+00> : vector<16x512xf32>
    %20 = tpu.matmul %18, %19, %cst_16 {dimension_numbers = #tpu.dot_dimension_numbers<[1], [0], [0], [1], [0, 0, 1, 1], [], []>} : vector<16x128xbf16>, vector<128x512xbf16>, vector<16x512xf32> -> vector<16x512xf32>
    %21 = arith.addf %17, %20 : vector<16x512xf32>
    %22 = vector.extract_strided_slice %21 {offsets = [0, 0], sizes = [16, 128], strides = [1, 1]} : vector<16x512xf32> to vector<16x128xf32>
    %cst_17 = arith.constant 5.000000e-01 : f32
    %23 = vector.broadcast %cst_17 : f32 to vector<16x128xf32>
    %24 = arith.mulf %23, %22 : vector<16x128xf32>
    %25 = math.tanh %24 : vector<16x128xf32>
    %cst_18 = arith.constant 1.000000e+00 : f32
    %26 = vector.broadcast %cst_18 : f32 to vector<16x128xf32>
    %27 = arith.addf %25, %26 : vector<16x128xf32>
    %cst_19 = arith.constant 5.000000e-01 : f32
    %28 = vector.broadcast %cst_19 : f32 to vector<16x128xf32>
    %29 = arith.mulf %28, %27 : vector<16x128xf32>
    %30 = vector.extract_strided_slice %21 {offsets = [0, 128], sizes = [16, 128], strides = [1, 1]} : vector<16x512xf32> to vector<16x128xf32>
    %cst_20 = arith.constant 5.000000e-01 : f32
    %31 = vector.broadcast %cst_20 : f32 to vector<16x128xf32>
    %32 = arith.mulf %31, %30 : vector<16x128xf32>
    %33 = math.tanh %32 : vector<16x128xf32>
    %cst_21 = arith.constant 1.000000e+00 : f32
    %34 = vector.broadcast %cst_21 : f32 to vector<16x128xf32>
    %35 = arith.addf %33, %34 : vector<16x128xf32>
    %cst_22 = arith.constant 5.000000e-01 : f32
    %36 = vector.broadcast %cst_22 : f32 to vector<16x128xf32>
    %37 = arith.mulf %36, %35 : vector<16x128xf32>
    %38 = vector.extract_strided_slice %21 {offsets = [0, 256], sizes = [16, 128], strides = [1, 1]} : vector<16x512xf32> to vector<16x128xf32>
    %39 = math.tanh %38 : vector<16x128xf32>
    %40 = vector.extract_strided_slice %21 {offsets = [0, 384], sizes = [16, 128], strides = [1, 1]} : vector<16x512xf32> to vector<16x128xf32>
    %cst_23 = arith.constant 5.000000e-01 : f32
    %41 = vector.broadcast %cst_23 : f32 to vector<16x128xf32>
    %42 = arith.mulf %41, %40 : vector<16x128xf32>
    %43 = math.tanh %42 : vector<16x128xf32>
    %cst_24 = arith.constant 1.000000e+00 : f32
    %44 = vector.broadcast %cst_24 : f32 to vector<16x128xf32>
    %45 = arith.addf %43, %44 : vector<16x128xf32>
    %cst_25 = arith.constant 5.000000e-01 : f32
    %46 = vector.broadcast %cst_25 : f32 to vector<16x128xf32>
    %47 = arith.mulf %46, %45 : vector<16x128xf32>
    %48 = arith.mulf %37, %10 : vector<16x128xf32>
    %49 = arith.mulf %29, %39 : vector<16x128xf32>
    %50 = arith.addf %48, %49 : vector<16x128xf32>
    %51 = math.tanh %50 : vector<16x128xf32>
    %52 = arith.mulf %47, %51 : vector<16x128xf32>
    %c1_i32 = arith.constant 1 : i32
    %c16_i32_26 = arith.constant 16 : i32
    %53 = arith.muli %c1_i32, %c16_i32_26 : i32
    %54 = tpu.assume_multiple %53, 16 : i32
    %55 = arith.index_cast %54 : i32 to index
    %c0_27 = arith.constant 0 : index
    %56 = vector.load %arg6[%55, %c0_27] : memref<128x512xbf16, #tpu.memory_space<vmem>>, vector<16x512xbf16>
    %57 = arith.extf %56 : vector<16x512xbf16> to vector<16x512xf32>
    %58 = vector.broadcast %8 : vector<1x512xf32> to vector<16x512xf32>
    %59 = arith.addf %57, %58 : vector<16x512xf32>
    %60 = arith.truncf %52 : vector<16x128xf32> to vector<16x128xbf16>
    %c0_28 = arith.constant 0 : index
    %c0_29 = arith.constant 0 : index
    %61 = vector.load %arg3[%c0_28, %c0_29] : memref<128x512xbf16, #tpu.memory_space<vmem>>, vector<128x512xbf16>
    %cst_30 = arith.constant dense<0.000000e+00> : vector<16x512xf32>
    %62 = tpu.matmul %60, %61, %cst_30 {dimension_numbers = #tpu.dot_dimension_numbers<[1], [0], [0], [1], [0, 0, 1, 1], [], []>} : vector<16x128xbf16>, vector<128x512xbf16>, vector<16x512xf32> -> vector<16x512xf32>
    %63 = arith.addf %59, %62 : vector<16x512xf32>
    %64 = vector.extract_strided_slice %63 {offsets = [0, 0], sizes = [16, 128], strides = [1, 1]} : vector<16x512xf32> to vector<16x128xf32>
    %cst_31 = arith.constant 5.000000e-01 : f32
    %65 = vector.broadcast %cst_31 : f32 to vector<16x128xf32>
    %66 = arith.mulf %65, %64 : vector<16x128xf32>
    %67 = math.tanh %66 : vector<16x128xf32>
    %cst_32 = arith.constant 1.000000e+00 : f32
    %68 = vector.broadcast %cst_32 : f32 to vector<16x128xf32>
    %69 = arith.addf %67, %68 : vector<16x128xf32>
    %cst_33 = arith.constant 5.000000e-01 : f32
    %70 = vector.broadcast %cst_33 : f32 to vector<16x128xf32>
    %71 = arith.mulf %70, %69 : vector<16x128xf32>
    %72 = vector.extract_strided_slice %63 {offsets = [0, 128], sizes = [16, 128], strides = [1, 1]} : vector<16x512xf32> to vector<16x128xf32>
    %cst_34 = arith.constant 5.000000e-01 : f32
    %73 = vector.broadcast %cst_34 : f32 to vector<16x128xf32>
    %74 = arith.mulf %73, %72 : vector<16x128xf32>
    %75 = math.tanh %74 : vector<16x128xf32>
    %cst_35 = arith.constant 1.000000e+00 : f32
    %76 = vector.broadcast %cst_35 : f32 to vector<16x128xf32>
    %77 = arith.addf %75, %76 : vector<16x128xf32>
    %cst_36 = arith.constant 5.000000e-01 : f32
    %78 = vector.broadcast %cst_36 : f32 to vector<16x128xf32>
    %79 = arith.mulf %78, %77 : vector<16x128xf32>
    %80 = vector.extract_strided_slice %63 {offsets = [0, 256], sizes = [16, 128], strides = [1, 1]} : vector<16x512xf32> to vector<16x128xf32>
    %81 = math.tanh %80 : vector<16x128xf32>
    %82 = vector.extract_strided_slice %63 {offsets = [0, 384], sizes = [16, 128], strides = [1, 1]} : vector<16x512xf32> to vector<16x128xf32>
    %cst_37 = arith.constant 5.000000e-01 : f32
    %83 = vector.broadcast %cst_37 : f32 to vector<16x128xf32>
    %84 = arith.mulf %83, %82 : vector<16x128xf32>
    %85 = math.tanh %84 : vector<16x128xf32>
    %cst_38 = arith.constant 1.000000e+00 : f32
    %86 = vector.broadcast %cst_38 : f32 to vector<16x128xf32>
    %87 = arith.addf %85, %86 : vector<16x128xf32>
    %cst_39 = arith.constant 5.000000e-01 : f32
    %88 = vector.broadcast %cst_39 : f32 to vector<16x128xf32>
    %89 = arith.mulf %88, %87 : vector<16x128xf32>
    %90 = arith.mulf %79, %50 : vector<16x128xf32>
    %91 = arith.mulf %71, %81 : vector<16x128xf32>
    %92 = arith.addf %90, %91 : vector<16x128xf32>
    %93 = math.tanh %92 : vector<16x128xf32>
    %94 = arith.mulf %89, %93 : vector<16x128xf32>
    %c2_i32 = arith.constant 2 : i32
    %c16_i32_40 = arith.constant 16 : i32
    %95 = arith.muli %c2_i32, %c16_i32_40 : i32
    %96 = tpu.assume_multiple %95, 16 : i32
    %97 = arith.index_cast %96 : i32 to index
    %c0_41 = arith.constant 0 : index
    %98 = vector.load %arg6[%97, %c0_41] : memref<128x512xbf16, #tpu.memory_space<vmem>>, vector<16x512xbf16>
    %99 = arith.extf %98 : vector<16x512xbf16> to vector<16x512xf32>
    %100 = vector.broadcast %8 : vector<1x512xf32> to vector<16x512xf32>
    %101 = arith.addf %99, %100 : vector<16x512xf32>
    %102 = arith.truncf %94 : vector<16x128xf32> to vector<16x128xbf16>
    %c0_42 = arith.constant 0 : index
    %c0_43 = arith.constant 0 : index
    %103 = vector.load %arg3[%c0_42, %c0_43] : memref<128x512xbf16, #tpu.memory_space<vmem>>, vector<128x512xbf16>
    %cst_44 = arith.constant dense<0.000000e+00> : vector<16x512xf32>
    %104 = tpu.matmul %102, %103, %cst_44 {dimension_numbers = #tpu.dot_dimension_numbers<[1], [0], [0], [1], [0, 0, 1, 1], [], []>} : vector<16x128xbf16>, vector<128x512xbf16>, vector<16x512xf32> -> vector<16x512xf32>
    %105 = arith.addf %101, %104 : vector<16x512xf32>
    %106 = vector.extract_strided_slice %105 {offsets = [0, 0], sizes = [16, 128], strides = [1, 1]} : vector<16x512xf32> to vector<16x128xf32>
    %cst_45 = arith.constant 5.000000e-01 : f32
    %107 = vector.broadcast %cst_45 : f32 to vector<16x128xf32>
    %108 = arith.mulf %107, %106 : vector<16x128xf32>
    %109 = math.tanh %108 : vector<16x128xf32>
    %cst_46 = arith.constant 1.000000e+00 : f32
    %110 = vector.broadcast %cst_46 : f32 to vector<16x128xf32>
    %111 = arith.addf %109, %110 : vector<16x128xf32>
    %cst_47 = arith.constant 5.000000e-01 : f32
    %112 = vector.broadcast %cst_47 : f32 to vector<16x128xf32>
    %113 = arith.mulf %112, %111 : vector<16x128xf32>
    %114 = vector.extract_strided_slice %105 {offsets = [0, 128], sizes = [16, 128], strides = [1, 1]} : vector<16x512xf32> to vector<16x128xf32>
    %cst_48 = arith.constant 5.000000e-01 : f32
    %115 = vector.broadcast %cst_48 : f32 to vector<16x128xf32>
    %116 = arith.mulf %115, %114 : vector<16x128xf32>
    %117 = math.tanh %116 : vector<16x128xf32>
    %cst_49 = arith.constant 1.000000e+00 : f32
    %118 = vector.broadcast %cst_49 : f32 to vector<16x128xf32>
    %119 = arith.addf %117, %118 : vector<16x128xf32>
    %cst_50 = arith.constant 5.000000e-01 : f32
    %120 = vector.broadcast %cst_50 : f32 to vector<16x128xf32>
    %121 = arith.mulf %120, %119 : vector<16x128xf32>
    %122 = vector.extract_strided_slice %105 {offsets = [0, 256], sizes = [16, 128], strides = [1, 1]} : vector<16x512xf32> to vector<16x128xf32>
    %123 = math.tanh %122 : vector<16x128xf32>
    %124 = vector.extract_strided_slice %105 {offsets = [0, 384], sizes = [16, 128], strides = [1, 1]} : vector<16x512xf32> to vector<16x128xf32>
    %cst_51 = arith.constant 5.000000e-01 : f32
    %125 = vector.broadcast %cst_51 : f32 to vector<16x128xf32>
    %126 = arith.mulf %125, %124 : vector<16x128xf32>
    %127 = math.tanh %126 : vector<16x128xf32>
    %cst_52 = arith.constant 1.000000e+00 : f32
    %128 = vector.broadcast %cst_52 : f32 to vector<16x128xf32>
    %129 = arith.addf %127, %128 : vector<16x128xf32>
    %cst_53 = arith.constant 5.000000e-01 : f32
    %130 = vector.broadcast %cst_53 : f32 to vector<16x128xf32>
    %131 = arith.mulf %130, %129 : vector<16x128xf32>
    %132 = arith.mulf %121, %92 : vector<16x128xf32>
    %133 = arith.mulf %113, %123 : vector<16x128xf32>
    %134 = arith.addf %132, %133 : vector<16x128xf32>
    %135 = math.tanh %134 : vector<16x128xf32>
    %136 = arith.mulf %131, %135 : vector<16x128xf32>
    %c3_i32 = arith.constant 3 : i32
    %c16_i32_54 = arith.constant 16 : i32
    %137 = arith.muli %c3_i32, %c16_i32_54 : i32
    %138 = tpu.assume_multiple %137, 16 : i32
    %139 = arith.index_cast %138 : i32 to index
    %c0_55 = arith.constant 0 : index
    %140 = vector.load %arg6[%139, %c0_55] : memref<128x512xbf16, #tpu.memory_space<vmem>>, vector<16x512xbf16>
    %141 = arith.extf %140 : vector<16x512xbf16> to vector<16x512xf32>
    %142 = vector.broadcast %8 : vector<1x512xf32> to vector<16x512xf32>
    %143 = arith.addf %141, %142 : vector<16x512xf32>
    %144 = arith.truncf %136 : vector<16x128xf32> to vector<16x128xbf16>
    %c0_56 = arith.constant 0 : index
    %c0_57 = arith.constant 0 : index
    %145 = vector.load %arg3[%c0_56, %c0_57] : memref<128x512xbf16, #tpu.memory_space<vmem>>, vector<128x512xbf16>
    %cst_58 = arith.constant dense<0.000000e+00> : vector<16x512xf32>
    %146 = tpu.matmul %144, %145, %cst_58 {dimension_numbers = #tpu.dot_dimension_numbers<[1], [0], [0], [1], [0, 0, 1, 1], [], []>} : vector<16x128xbf16>, vector<128x512xbf16>, vector<16x512xf32> -> vector<16x512xf32>
    %147 = arith.addf %143, %146 : vector<16x512xf32>
    %148 = vector.extract_strided_slice %147 {offsets = [0, 0], sizes = [16, 128], strides = [1, 1]} : vector<16x512xf32> to vector<16x128xf32>
    %cst_59 = arith.constant 5.000000e-01 : f32
    %149 = vector.broadcast %cst_59 : f32 to vector<16x128xf32>
    %150 = arith.mulf %149, %148 : vector<16x128xf32>
    %151 = math.tanh %150 : vector<16x128xf32>
    %cst_60 = arith.constant 1.000000e+00 : f32
    %152 = vector.broadcast %cst_60 : f32 to vector<16x128xf32>
    %153 = arith.addf %151, %152 : vector<16x128xf32>
    %cst_61 = arith.constant 5.000000e-01 : f32
    %154 = vector.broadcast %cst_61 : f32 to vector<16x128xf32>
    %155 = arith.mulf %154, %153 : vector<16x128xf32>
    %156 = vector.extract_strided_slice %147 {offsets = [0, 128], sizes = [16, 128], strides = [1, 1]} : vector<16x512xf32> to vector<16x128xf32>
    %cst_62 = arith.constant 5.000000e-01 : f32
    %157 = vector.broadcast %cst_62 : f32 to vector<16x128xf32>
    %158 = arith.mulf %157, %156 : vector<16x128xf32>
    %159 = math.tanh %158 : vector<16x128xf32>
    %cst_63 = arith.constant 1.000000e+00 : f32
    %160 = vector.broadcast %cst_63 : f32 to vector<16x128xf32>
    %161 = arith.addf %159, %160 : vector<16x128xf32>
    %cst_64 = arith.constant 5.000000e-01 : f32
    %162 = vector.broadcast %cst_64 : f32 to vector<16x128xf32>
    %163 = arith.mulf %162, %161 : vector<16x128xf32>
    %164 = vector.extract_strided_slice %147 {offsets = [0, 256], sizes = [16, 128], strides = [1, 1]} : vector<16x512xf32> to vector<16x128xf32>
    %165 = math.tanh %164 : vector<16x128xf32>
    %166 = vector.extract_strided_slice %147 {offsets = [0, 384], sizes = [16, 128], strides = [1, 1]} : vector<16x512xf32> to vector<16x128xf32>
    %cst_65 = arith.constant 5.000000e-01 : f32
    %167 = vector.broadcast %cst_65 : f32 to vector<16x128xf32>
    %168 = arith.mulf %167, %166 : vector<16x128xf32>
    %169 = math.tanh %168 : vector<16x128xf32>
    %cst_66 = arith.constant 1.000000e+00 : f32
    %170 = vector.broadcast %cst_66 : f32 to vector<16x128xf32>
    %171 = arith.addf %169, %170 : vector<16x128xf32>
    %cst_67 = arith.constant 5.000000e-01 : f32
    %172 = vector.broadcast %cst_67 : f32 to vector<16x128xf32>
    %173 = arith.mulf %172, %171 : vector<16x128xf32>
    %174 = arith.mulf %163, %134 : vector<16x128xf32>
    %175 = arith.mulf %155, %165 : vector<16x128xf32>
    %176 = arith.addf %174, %175 : vector<16x128xf32>
    %177 = math.tanh %176 : vector<16x128xf32>
    %178 = arith.mulf %173, %177 : vector<16x128xf32>
    %c4_i32 = arith.constant 4 : i32
    %c16_i32_68 = arith.constant 16 : i32
    %179 = arith.muli %c4_i32, %c16_i32_68 : i32
    %180 = tpu.assume_multiple %179, 16 : i32
    %181 = arith.index_cast %180 : i32 to index
    %c0_69 = arith.constant 0 : index
    %182 = vector.load %arg6[%181, %c0_69] : memref<128x512xbf16, #tpu.memory_space<vmem>>, vector<16x512xbf16>
    %183 = arith.extf %182 : vector<16x512xbf16> to vector<16x512xf32>
    %184 = vector.broadcast %8 : vector<1x512xf32> to vector<16x512xf32>
    %185 = arith.addf %183, %184 : vector<16x512xf32>
    %186 = arith.truncf %178 : vector<16x128xf32> to vector<16x128xbf16>
    %c0_70 = arith.constant 0 : index
    %c0_71 = arith.constant 0 : index
    %187 = vector.load %arg3[%c0_70, %c0_71] : memref<128x512xbf16, #tpu.memory_space<vmem>>, vector<128x512xbf16>
    %cst_72 = arith.constant dense<0.000000e+00> : vector<16x512xf32>
    %188 = tpu.matmul %186, %187, %cst_72 {dimension_numbers = #tpu.dot_dimension_numbers<[1], [0], [0], [1], [0, 0, 1, 1], [], []>} : vector<16x128xbf16>, vector<128x512xbf16>, vector<16x512xf32> -> vector<16x512xf32>
    %189 = arith.addf %185, %188 : vector<16x512xf32>
    %190 = vector.extract_strided_slice %189 {offsets = [0, 0], sizes = [16, 128], strides = [1, 1]} : vector<16x512xf32> to vector<16x128xf32>
    %cst_73 = arith.constant 5.000000e-01 : f32
    %191 = vector.broadcast %cst_73 : f32 to vector<16x128xf32>
    %192 = arith.mulf %191, %190 : vector<16x128xf32>
    %193 = math.tanh %192 : vector<16x128xf32>
    %cst_74 = arith.constant 1.000000e+00 : f32
    %194 = vector.broadcast %cst_74 : f32 to vector<16x128xf32>
    %195 = arith.addf %193, %194 : vector<16x128xf32>
    %cst_75 = arith.constant 5.000000e-01 : f32
    %196 = vector.broadcast %cst_75 : f32 to vector<16x128xf32>
    %197 = arith.mulf %196, %195 : vector<16x128xf32>
    %198 = vector.extract_strided_slice %189 {offsets = [0, 128], sizes = [16, 128], strides = [1, 1]} : vector<16x512xf32> to vector<16x128xf32>
    %cst_76 = arith.constant 5.000000e-01 : f32
    %199 = vector.broadcast %cst_76 : f32 to vector<16x128xf32>
    %200 = arith.mulf %199, %198 : vector<16x128xf32>
    %201 = math.tanh %200 : vector<16x128xf32>
    %cst_77 = arith.constant 1.000000e+00 : f32
    %202 = vector.broadcast %cst_77 : f32 to vector<16x128xf32>
    %203 = arith.addf %201, %202 : vector<16x128xf32>
    %cst_78 = arith.constant 5.000000e-01 : f32
    %204 = vector.broadcast %cst_78 : f32 to vector<16x128xf32>
    %205 = arith.mulf %204, %203 : vector<16x128xf32>
    %206 = vector.extract_strided_slice %189 {offsets = [0, 256], sizes = [16, 128], strides = [1, 1]} : vector<16x512xf32> to vector<16x128xf32>
    %207 = math.tanh %206 : vector<16x128xf32>
    %208 = vector.extract_strided_slice %189 {offsets = [0, 384], sizes = [16, 128], strides = [1, 1]} : vector<16x512xf32> to vector<16x128xf32>
    %cst_79 = arith.constant 5.000000e-01 : f32
    %209 = vector.broadcast %cst_79 : f32 to vector<16x128xf32>
    %210 = arith.mulf %209, %208 : vector<16x128xf32>
    %211 = math.tanh %210 : vector<16x128xf32>
    %cst_80 = arith.constant 1.000000e+00 : f32
    %212 = vector.broadcast %cst_80 : f32 to vector<16x128xf32>
    %213 = arith.addf %211, %212 : vector<16x128xf32>
    %cst_81 = arith.constant 5.000000e-01 : f32
    %214 = vector.broadcast %cst_81 : f32 to vector<16x128xf32>
    %215 = arith.mulf %214, %213 : vector<16x128xf32>
    %216 = arith.mulf %205, %176 : vector<16x128xf32>
    %217 = arith.mulf %197, %207 : vector<16x128xf32>
    %218 = arith.addf %216, %217 : vector<16x128xf32>
    %219 = math.tanh %218 : vector<16x128xf32>
    %220 = arith.mulf %215, %219 : vector<16x128xf32>
    %c5_i32 = arith.constant 5 : i32
    %c16_i32_82 = arith.constant 16 : i32
    %221 = arith.muli %c5_i32, %c16_i32_82 : i32
    %222 = tpu.assume_multiple %221, 16 : i32
    %223 = arith.index_cast %222 : i32 to index
    %c0_83 = arith.constant 0 : index
    %224 = vector.load %arg6[%223, %c0_83] : memref<128x512xbf16, #tpu.memory_space<vmem>>, vector<16x512xbf16>
    %225 = arith.extf %224 : vector<16x512xbf16> to vector<16x512xf32>
    %226 = vector.broadcast %8 : vector<1x512xf32> to vector<16x512xf32>
    %227 = arith.addf %225, %226 : vector<16x512xf32>
    %228 = arith.truncf %220 : vector<16x128xf32> to vector<16x128xbf16>
    %c0_84 = arith.constant 0 : index
    %c0_85 = arith.constant 0 : index
    %229 = vector.load %arg3[%c0_84, %c0_85] : memref<128x512xbf16, #tpu.memory_space<vmem>>, vector<128x512xbf16>
    %cst_86 = arith.constant dense<0.000000e+00> : vector<16x512xf32>
    %230 = tpu.matmul %228, %229, %cst_86 {dimension_numbers = #tpu.dot_dimension_numbers<[1], [0], [0], [1], [0, 0, 1, 1], [], []>} : vector<16x128xbf16>, vector<128x512xbf16>, vector<16x512xf32> -> vector<16x512xf32>
    %231 = arith.addf %227, %230 : vector<16x512xf32>
    %232 = vector.extract_strided_slice %231 {offsets = [0, 0], sizes = [16, 128], strides = [1, 1]} : vector<16x512xf32> to vector<16x128xf32>
    %cst_87 = arith.constant 5.000000e-01 : f32
    %233 = vector.broadcast %cst_87 : f32 to vector<16x128xf32>
    %234 = arith.mulf %233, %232 : vector<16x128xf32>
    %235 = math.tanh %234 : vector<16x128xf32>
    %cst_88 = arith.constant 1.000000e+00 : f32
    %236 = vector.broadcast %cst_88 : f32 to vector<16x128xf32>
    %237 = arith.addf %235, %236 : vector<16x128xf32>
    %cst_89 = arith.constant 5.000000e-01 : f32
    %238 = vector.broadcast %cst_89 : f32 to vector<16x128xf32>
    %239 = arith.mulf %238, %237 : vector<16x128xf32>
    %240 = vector.extract_strided_slice %231 {offsets = [0, 128], sizes = [16, 128], strides = [1, 1]} : vector<16x512xf32> to vector<16x128xf32>
    %cst_90 = arith.constant 5.000000e-01 : f32
    %241 = vector.broadcast %cst_90 : f32 to vector<16x128xf32>
    %242 = arith.mulf %241, %240 : vector<16x128xf32>
    %243 = math.tanh %242 : vector<16x128xf32>
    %cst_91 = arith.constant 1.000000e+00 : f32
    %244 = vector.broadcast %cst_91 : f32 to vector<16x128xf32>
    %245 = arith.addf %243, %244 : vector<16x128xf32>
    %cst_92 = arith.constant 5.000000e-01 : f32
    %246 = vector.broadcast %cst_92 : f32 to vector<16x128xf32>
    %247 = arith.mulf %246, %245 : vector<16x128xf32>
    %248 = vector.extract_strided_slice %231 {offsets = [0, 256], sizes = [16, 128], strides = [1, 1]} : vector<16x512xf32> to vector<16x128xf32>
    %249 = math.tanh %248 : vector<16x128xf32>
    %250 = vector.extract_strided_slice %231 {offsets = [0, 384], sizes = [16, 128], strides = [1, 1]} : vector<16x512xf32> to vector<16x128xf32>
    %cst_93 = arith.constant 5.000000e-01 : f32
    %251 = vector.broadcast %cst_93 : f32 to vector<16x128xf32>
    %252 = arith.mulf %251, %250 : vector<16x128xf32>
    %253 = math.tanh %252 : vector<16x128xf32>
    %cst_94 = arith.constant 1.000000e+00 : f32
    %254 = vector.broadcast %cst_94 : f32 to vector<16x128xf32>
    %255 = arith.addf %253, %254 : vector<16x128xf32>
    %cst_95 = arith.constant 5.000000e-01 : f32
    %256 = vector.broadcast %cst_95 : f32 to vector<16x128xf32>
    %257 = arith.mulf %256, %255 : vector<16x128xf32>
    %258 = arith.mulf %247, %218 : vector<16x128xf32>
    %259 = arith.mulf %239, %249 : vector<16x128xf32>
    %260 = arith.addf %258, %259 : vector<16x128xf32>
    %261 = math.tanh %260 : vector<16x128xf32>
    %262 = arith.mulf %257, %261 : vector<16x128xf32>
    %c6_i32 = arith.constant 6 : i32
    %c16_i32_96 = arith.constant 16 : i32
    %263 = arith.muli %c6_i32, %c16_i32_96 : i32
    %264 = tpu.assume_multiple %263, 16 : i32
    %265 = arith.index_cast %264 : i32 to index
    %c0_97 = arith.constant 0 : index
    %266 = vector.load %arg6[%265, %c0_97] : memref<128x512xbf16, #tpu.memory_space<vmem>>, vector<16x512xbf16>
    %267 = arith.extf %266 : vector<16x512xbf16> to vector<16x512xf32>
    %268 = vector.broadcast %8 : vector<1x512xf32> to vector<16x512xf32>
    %269 = arith.addf %267, %268 : vector<16x512xf32>
    %270 = arith.truncf %262 : vector<16x128xf32> to vector<16x128xbf16>
    %c0_98 = arith.constant 0 : index
    %c0_99 = arith.constant 0 : index
    %271 = vector.load %arg3[%c0_98, %c0_99] : memref<128x512xbf16, #tpu.memory_space<vmem>>, vector<128x512xbf16>
    %cst_100 = arith.constant dense<0.000000e+00> : vector<16x512xf32>
    %272 = tpu.matmul %270, %271, %cst_100 {dimension_numbers = #tpu.dot_dimension_numbers<[1], [0], [0], [1], [0, 0, 1, 1], [], []>} : vector<16x128xbf16>, vector<128x512xbf16>, vector<16x512xf32> -> vector<16x512xf32>
    %273 = arith.addf %269, %272 : vector<16x512xf32>
    %274 = vector.extract_strided_slice %273 {offsets = [0, 0], sizes = [16, 128], strides = [1, 1]} : vector<16x512xf32> to vector<16x128xf32>
    %cst_101 = arith.constant 5.000000e-01 : f32
    %275 = vector.broadcast %cst_101 : f32 to vector<16x128xf32>
    %276 = arith.mulf %275, %274 : vector<16x128xf32>
    %277 = math.tanh %276 : vector<16x128xf32>
    %cst_102 = arith.constant 1.000000e+00 : f32
    %278 = vector.broadcast %cst_102 : f32 to vector<16x128xf32>
    %279 = arith.addf %277, %278 : vector<16x128xf32>
    %cst_103 = arith.constant 5.000000e-01 : f32
    %280 = vector.broadcast %cst_103 : f32 to vector<16x128xf32>
    %281 = arith.mulf %280, %279 : vector<16x128xf32>
    %282 = vector.extract_strided_slice %273 {offsets = [0, 128], sizes = [16, 128], strides = [1, 1]} : vector<16x512xf32> to vector<16x128xf32>
    %cst_104 = arith.constant 5.000000e-01 : f32
    %283 = vector.broadcast %cst_104 : f32 to vector<16x128xf32>
    %284 = arith.mulf %283, %282 : vector<16x128xf32>
    %285 = math.tanh %284 : vector<16x128xf32>
    %cst_105 = arith.constant 1.000000e+00 : f32
    %286 = vector.broadcast %cst_105 : f32 to vector<16x128xf32>
    %287 = arith.addf %285, %286 : vector<16x128xf32>
    %cst_106 = arith.constant 5.000000e-01 : f32
    %288 = vector.broadcast %cst_106 : f32 to vector<16x128xf32>
    %289 = arith.mulf %288, %287 : vector<16x128xf32>
    %290 = vector.extract_strided_slice %273 {offsets = [0, 256], sizes = [16, 128], strides = [1, 1]} : vector<16x512xf32> to vector<16x128xf32>
    %291 = math.tanh %290 : vector<16x128xf32>
    %292 = vector.extract_strided_slice %273 {offsets = [0, 384], sizes = [16, 128], strides = [1, 1]} : vector<16x512xf32> to vector<16x128xf32>
    %cst_107 = arith.constant 5.000000e-01 : f32
    %293 = vector.broadcast %cst_107 : f32 to vector<16x128xf32>
    %294 = arith.mulf %293, %292 : vector<16x128xf32>
    %295 = math.tanh %294 : vector<16x128xf32>
    %cst_108 = arith.constant 1.000000e+00 : f32
    %296 = vector.broadcast %cst_108 : f32 to vector<16x128xf32>
    %297 = arith.addf %295, %296 : vector<16x128xf32>
    %cst_109 = arith.constant 5.000000e-01 : f32
    %298 = vector.broadcast %cst_109 : f32 to vector<16x128xf32>
    %299 = arith.mulf %298, %297 : vector<16x128xf32>
    %300 = arith.mulf %289, %260 : vector<16x128xf32>
    %301 = arith.mulf %281, %291 : vector<16x128xf32>
    %302 = arith.addf %300, %301 : vector<16x128xf32>
    %303 = math.tanh %302 : vector<16x128xf32>
    %304 = arith.mulf %299, %303 : vector<16x128xf32>
    %c7_i32 = arith.constant 7 : i32
    %c16_i32_110 = arith.constant 16 : i32
    %305 = arith.muli %c7_i32, %c16_i32_110 : i32
    %306 = tpu.assume_multiple %305, 16 : i32
    %307 = arith.index_cast %306 : i32 to index
    %c0_111 = arith.constant 0 : index
    %308 = vector.load %arg6[%307, %c0_111] : memref<128x512xbf16, #tpu.memory_space<vmem>>, vector<16x512xbf16>
    %309 = arith.extf %308 : vector<16x512xbf16> to vector<16x512xf32>
    %310 = vector.broadcast %8 : vector<1x512xf32> to vector<16x512xf32>
    %311 = arith.addf %309, %310 : vector<16x512xf32>
    %312 = arith.truncf %304 : vector<16x128xf32> to vector<16x128xbf16>
    %c0_112 = arith.constant 0 : index
    %c0_113 = arith.constant 0 : index
    %313 = vector.load %arg3[%c0_112, %c0_113] : memref<128x512xbf16, #tpu.memory_space<vmem>>, vector<128x512xbf16>
    %cst_114 = arith.constant dense<0.000000e+00> : vector<16x512xf32>
    %314 = tpu.matmul %312, %313, %cst_114 {dimension_numbers = #tpu.dot_dimension_numbers<[1], [0], [0], [1], [0, 0, 1, 1], [], []>} : vector<16x128xbf16>, vector<128x512xbf16>, vector<16x512xf32> -> vector<16x512xf32>
    %315 = arith.addf %311, %314 : vector<16x512xf32>
    %316 = vector.extract_strided_slice %315 {offsets = [0, 0], sizes = [16, 128], strides = [1, 1]} : vector<16x512xf32> to vector<16x128xf32>
    %cst_115 = arith.constant 5.000000e-01 : f32
    %317 = vector.broadcast %cst_115 : f32 to vector<16x128xf32>
    %318 = arith.mulf %317, %316 : vector<16x128xf32>
    %319 = math.tanh %318 : vector<16x128xf32>
    %cst_116 = arith.constant 1.000000e+00 : f32
    %320 = vector.broadcast %cst_116 : f32 to vector<16x128xf32>
    %321 = arith.addf %319, %320 : vector<16x128xf32>
    %cst_117 = arith.constant 5.000000e-01 : f32
    %322 = vector.broadcast %cst_117 : f32 to vector<16x128xf32>
    %323 = arith.mulf %322, %321 : vector<16x128xf32>
    %324 = vector.extract_strided_slice %315 {offsets = [0, 128], sizes = [16, 128], strides = [1, 1]} : vector<16x512xf32> to vector<16x128xf32>
    %cst_118 = arith.constant 5.000000e-01 : f32
    %325 = vector.broadcast %cst_118 : f32 to vector<16x128xf32>
    %326 = arith.mulf %325, %324 : vector<16x128xf32>
    %327 = math.tanh %326 : vector<16x128xf32>
    %cst_119 = arith.constant 1.000000e+00 : f32
    %328 = vector.broadcast %cst_119 : f32 to vector<16x128xf32>
    %329 = arith.addf %327, %328 : vector<16x128xf32>
    %cst_120 = arith.constant 5.000000e-01 : f32
    %330 = vector.broadcast %cst_120 : f32 to vector<16x128xf32>
    %331 = arith.mulf %330, %329 : vector<16x128xf32>
    %332 = vector.extract_strided_slice %315 {offsets = [0, 256], sizes = [16, 128], strides = [1, 1]} : vector<16x512xf32> to vector<16x128xf32>
    %333 = math.tanh %332 : vector<16x128xf32>
    %334 = vector.extract_strided_slice %315 {offsets = [0, 384], sizes = [16, 128], strides = [1, 1]} : vector<16x512xf32> to vector<16x128xf32>
    %cst_121 = arith.constant 5.000000e-01 : f32
    %335 = vector.broadcast %cst_121 : f32 to vector<16x128xf32>
    %336 = arith.mulf %335, %334 : vector<16x128xf32>
    %337 = math.tanh %336 : vector<16x128xf32>
    %cst_122 = arith.constant 1.000000e+00 : f32
    %338 = vector.broadcast %cst_122 : f32 to vector<16x128xf32>
    %339 = arith.addf %337, %338 : vector<16x128xf32>
    %cst_123 = arith.constant 5.000000e-01 : f32
    %340 = vector.broadcast %cst_123 : f32 to vector<16x128xf32>
    %341 = arith.mulf %340, %339 : vector<16x128xf32>
    %342 = arith.mulf %331, %302 : vector<16x128xf32>
    %343 = arith.mulf %323, %333 : vector<16x128xf32>
    %344 = arith.addf %342, %343 : vector<16x128xf32>
    %345 = math.tanh %344 : vector<16x128xf32>
    %346 = arith.mulf %341, %345 : vector<16x128xf32>
    %c8_i32 = arith.constant 8 : i32
    %c0_124 = arith.constant 0 : index
    %c0_125 = arith.constant 0 : index
    %347 = vector.load %arg7[%c0_124, %c0_125] : memref<16x128xf32, #tpu.memory_space<vmem>>, vector<16x128xf32>
    tpu.vector_store %arg7[%c0_124, %c0_125], %346 {strides = array<i32>} : memref<16x128xf32, #tpu.memory_space<vmem>>, vector<16x128xf32>,
    %c0_126 = arith.constant 0 : index
    %c0_127 = arith.constant 0 : index
    %348 = vector.load %arg8[%c0_126, %c0_127] : memref<16x128xf32, #tpu.memory_space<vmem>>, vector<16x128xf32>
    tpu.vector_store %arg8[%c0_126, %c0_127], %344 {strides = array<i32>} : memref<16x128xf32, #tpu.memory_space<vmem>>, vector<16x128xf32>,
    %c0_i32_128 = arith.constant 0 : i32
    %349 = arith.cmpi eq, %arg0, %c0_i32_128 : i32
    %350 = arith.extui %349 : i1 to i32
    %c0_i32_129 = arith.constant 0 : i32
    %351 = arith.cmpi ne, %350, %c0_i32_129 : i32
    scf.if %351 {
      %352 = vector.extract_strided_slice %346 {offsets = [0, 0], sizes = [8, 128], strides = [1, 1]} : vector<16x128xf32> to vector<8x128xf32>
      %353 = vector.extract_strided_slice %346 {offsets = [8, 0], sizes = [8, 128], strides = [1, 1]} : vector<16x128xf32> to vector<8x128xf32>
      %354 = arith.subf %352, %353 : vector<8x128xf32>
      %355 = math.absf %354 : vector<8x128xf32>
      %cst_130 = arith.constant dense<0.000000e+00> : vector<8xf32>
      %356 = vector.multi_reduction <add>, %355, %cst_130 [1] : vector<8x128xf32> to vector<8xf32>
      %cst_131 = arith.constant 0.000000e+00 : f32
      %357 = vector.broadcast %cst_131 : f32 to vector<8xf32>
      %358 = arith.subf %357, %356 : vector<8xf32>
      %359 = math.exp %358 : vector<8xf32>
      %360 = vector.shape_cast %359 : vector<8xf32> to vector<1x8xf32>
      %c0_132 = arith.constant 0 : index
      %c0_133 = arith.constant 0 : index
      %361 = vector.load %arg5[%c0_132, %c0_133] : memref<1x8xf32, #tpu.memory_space<vmem>>, vector<1x8xf32>
      tpu.vector_store %arg5[%c0_132, %c0_133], %360 {strides = array<i32>} : memref<1x8xf32, #tpu.memory_space<vmem>>, vector<1x8xf32>,
    } else {
    }
    return
  }
  func.func @transform_0(%arg0: i32) -> (i32, i32) {
    %c0_i32 = arith.constant 0 : i32
    %c0_i32_0 = arith.constant 0 : i32
    return %arg0, %c0_i32 : i32, i32
  }
  func.func @transform_1(%arg0: i32) -> (i32, i32) {
    %c0_i32 = arith.constant 0 : i32
    %c0_i32_0 = arith.constant 0 : i32
    %c0_i32_1 = arith.constant 0 : i32
    return %c0_i32, %c0_i32_0 : i32, i32
  }
  func.func @transform_2(%arg0: i32) -> (i32, i32) {
    %c0_i32 = arith.constant 0 : i32
    %c0_i32_0 = arith.constant 0 : i32
    %c0_i32_1 = arith.constant 0 : i32
    return %c0_i32, %c0_i32_0 : i32, i32
  }
  func.func @transform_3(%arg0: i32) -> (i32, i32) {
    %c0_i32 = arith.constant 0 : i32
    %c0_i32_0 = arith.constant 0 : i32
    %c0_i32_1 = arith.constant 0 : i32
    return %c0_i32, %c0_i32_0 : i32, i32
  }
  func.func @transform_4(%arg0: i32) -> (i32, i32) {
    %c0_i32 = arith.constant 0 : i32
    %c0_i32_0 = arith.constant 0 : i32
    %c0_i32_1 = arith.constant 0 : i32
    return %c0_i32, %c0_i32_0 : i32, i32
  }
}

</mosaic_0001>

<llo_original>
// kernel: malstm_forward.1
$region0: #{malstm_forward.1}
  #allocation0 [shape = 'u32[]', space=smem, size = 0x4, offset = 0x4, fixed_abs, tag = 'smem constant byte address 0x4 - core index']
  #allocation1 [shape = 'u32[144,128]{1,0:T(1,128)}', space=vmem, size = 0x12000, scoped, tag = 'internal scratch']
  #allocation2 [shape = 'bf16[128,512]{1,0:T(16,128)(2,1)}', space=vmem, size = 0x20000, scoped, tag = 'scratch operand']
  #allocation3 [shape = 'f32[16,128]{1,0:T(8,128)}', space=vmem, size = 0x2000, scoped, tag = 'scratch operand']
  #allocation4 [shape = 'f32[16,128]{1,0:T(8,128)}', space=vmem, size = 0x2000, scoped, tag = 'scratch operand']
  %s0 = inlined_call_operand.vmem [shape: bf16[128,32], index: 0, kind: input, shape index: {}]
  %s1 = inlined_call_operand.vmem [shape: bf16[32,512], index: 1, kind: input, shape index: {}]
  %s2 = inlined_call_operand.vmem [shape: bf16[128,512], index: 2, kind: input, shape index: {}]
  %s3 = inlined_call_operand.vmem [shape: f32[1,512], index: 3, kind: input, shape index: {}]
  %s4 = inlined_call_operand.hbm [shape: f32[1,8], index: 4, kind: output, shape index: {}]
  %s5 = sld [smem:[#allocation0]]
  $region34: #{malstm_forward.1} parent=0
    _
  %s7 = ssub.s32 1, %s5
  %s8 = scalar_select 0, %s7, %s5
  $region1: #{malstm_forward.1} parent=0
    #allocation5 [shape = 'u8[512]{0}', space=vmem, size = 0x400, scoped, tag = 'output window, operand 0, single buffered']
    #allocation6 [shape = 's32[1]{0}', space=sflag, size = 0x4, scoped, tag = 'scoped memory for malstm_forward.1']
    %9 = vsyncpa [#allocation6], 0
    // Predicated region
    $region2: #{malstm_forward.1} parent=1 // pred_check
      _
    $region3: #{malstm_forward.1} parent=1 // pred_check_branch
      %11 = sbr.rel (0) target = $region5
    $region4: #{malstm_forward.1} parent=1 // pred_region
      _
    $region5: #{malstm_forward.1} parent=1 // pred_fallthru
      _
    // Predicated region
    $region6: #{malstm_forward.1} parent=1 // pred_check
      _
    $region7: #{malstm_forward.1} parent=1 // pred_check_branch
      %13 = sbr.rel (0) target = $region9
    $region8: #{malstm_forward.1} parent=1 // pred_region
      _
    $region9: #{malstm_forward.1} parent=1 // pred_fallthru
      _
    // Predicated region
    $region10: #{malstm_forward.1} parent=1 // pred_check
      _
    $region11: #{malstm_forward.1} parent=1 // pred_check_branch
      %15 = sbr.rel (0) target = $region13
    $region12: #{malstm_forward.1} parent=1 // pred_region
      _
    $region13: #{malstm_forward.1} parent=1 // pred_fallthru
      _
    // Predicated region
    $region14: #{malstm_forward.1} parent=1 // pred_check
      _
    $region15: #{malstm_forward.1} parent=1 // pred_check_branch
      %17 = sbr.rel (0) target = $region17
    $region16: #{malstm_forward.1} parent=1 // pred_region
      _
    $region17: #{malstm_forward.1} parent=1 // pred_fallthru
      _
    %p19 = scmp.eq.s32.totalorder 0, 0
    // Predicated region
    $region18: #{malstm_forward.1} parent=1 // pred_check
      %p20 = pneg %p19
    $region19: #{malstm_forward.1} parent=1 // pred_check_branch
      %22 = sbr.rel (%p20) target = $region21
    $region20: #{malstm_forward.1} parent=1 // pred_region
      %23 = vst [vmem:[#allocation3] sm:$0xff] 0.0
      %24 = vst [vmem:[#allocation3 + $0x8] sm:$0xff] 0.0
      %25 = vst [vmem:[#allocation4] sm:$0xff] 0.0
      %26 = vst [vmem:[#allocation4 + $0x8] sm:$0xff] 0.0
    $region21: #{malstm_forward.1} parent=1 // pred_fallthru
      _
    %v27 = vld [vmem:[%s0] sm:$0xf]
    %v28 = vld [vmem:[%s0 + $0x4] sm:$0xf]
    %v29 = vld [vmem:[%s0 + $0x8] sm:$0xf]
    %v30 = vld [vmem:[%s0 + $0xc] sm:$0xf]
    %v31 = vld [vmem:[%s0 + $0x10] sm:$0xf]
    %v32 = vld [vmem:[%s0 + $0x14] sm:$0xf]
    %v33 = vld [vmem:[%s0 + $0x18] sm:$0xf]
    %v34 = vld [vmem:[%s0 + $0x1c] sm:$0xf]
    %v35 = vld [vmem:[%s0 + $0x20] sm:$0xf]
    %v36 = vld [vmem:[%s0 + $0x24] sm:$0xf]
    %v37 = vld [vmem:[%s0 + $0x28] sm:$0xf]
    %v38 = vld [vmem:[%s0 + $0x2c] sm:$0xf]
    %v39 = vld [vmem:[%s0 + $0x30] sm:$0xf]
    %v40 = vld [vmem:[%s0 + $0x34] sm:$0xf]
    %v41 = vld [vmem:[%s0 + $0x38] sm:$0xf]
    %v42 = vld [vmem:[%s0 + $0x3c] sm:$0xf]
    %v43 = vld [vmem:[%s1] sm:$0xff]
    %v44 = vld [vmem:[%s1 + $0x8] sm:$0xff]
    %v45 = vld [vmem:[%s1 + $0x10] sm:$0xff]
    %v46 = vld [vmem:[%s1 + $0x18] sm:$0xff]
    %v47 = vld [vmem:[%s1 + $0x20] sm:$0xff]
    %v48 = vld [vmem:[%s1 + $0x28] sm:$0xff]
    %v49 = vld [vmem:[%s1 + $0x30] sm:$0xff]
    %v50 = vld [vmem:[%s1 + $0x38] sm:$0xff]
    %v67 = vunpack.c.l.b16 %v27
    %v68 = vunpack.c.l.b16 %v28
    %v69 = vunpack.c.l.b16 %v29
    %v70 = vunpack.c.l.b16 %v30
    %v71 = vunpack.c.l.b16 %v31
    %v72 = vunpack.c.l.b16 %v32
    %v73 = vunpack.c.l.b16 %v33
    %v74 = vunpack.c.l.b16 %v34
    %v75 = vunpack.c.l.b16 %v35
    %v76 = vunpack.c.l.b16 %v36
    %v77 = vunpack.c.l.b16 %v37
    %v78 = vunpack.c.l.b16 %v38
    %v79 = vunpack.c.l.b16 %v39
    %v80 = vunpack.c.l.b16 %v40
    %v81 = vunpack.c.l.b16 %v41
    %v82 = vunpack.c.l.b16 %v42
    %v83 = vpack.c.b16 %v68, %v67
    %v84 = vpack.c.b16 %v70, %v69
    %v85 = vpack.c.b16 %v72, %v71
    %v86 = vpack.c.b16 %v74, %v73
    %v87 = vpack.c.b16 %v76, %v75
    %v88 = vpack.c.b16 %v78, %v77
    %v89 = vpack.c.b16 %v80, %v79
    %v90 = vpack.c.b16 %v82, %v81
    %v99 = vunpack.c.l.b16 %v43
    %v100 = vunpack.c.h.b16 %v43
    %v101 = vunpack.c.l.b16 %v44
    %v102 = vunpack.c.h.b16 %v44
    %v103 = vunpack.c.l.b16 %v45
    %v104 = vunpack.c.h.b16 %v45
    %v105 = vunpack.c.l.b16 %v46
    %v106 = vunpack.c.h.b16 %v46
    %v107 = vunpack.c.l.b16 %v47
    %v108 = vunpack.c.h.b16 %v47
    %v109 = vunpack.c.l.b16 %v48
    %v110 = vunpack.c.h.b16 %v48
    %v111 = vunpack.c.l.b16 %v49
    %v112 = vunpack.c.h.b16 %v49
    %v113 = vunpack.c.l.b16 %v50
    %v114 = vunpack.c.h.b16 %v50
    %v115 = vpack.c.b16 %v103, %v99
    %v116 = vpack.c.b16 %v104, %v100
    %v117 = vpack.c.b16 %v105, %v101
    %v118 = vpack.c.b16 %v106, %v102
    %v119 = vpack.c.b16 %v111, %v107
    %v120 = vpack.c.b16 %v112, %v108
    %v121 = vpack.c.b16 %v113, %v109
    %v122 = vpack.c.b16 %v114, %v110
    %vm131 = vcmask 261120
    %v133 = vsel %vm131, %v83, 0
    %v136 = vsel %vm131, %v84, 0
    %v139 = vsel %vm131, %v85, 0
    %v142 = vsel %vm131, %v86, 0
    %v145 = vsel %vm131, %v87, 0
    %v148 = vsel %vm131, %v88, 0
    %v151 = vsel %vm131, %v89, 0
    %v154 = vsel %vm131, %v90, 0
    %156 = vmatprep.subr.bf16.mxu0 %v116
    %157 = vmatpush1.bf16.msra.mxu0 %v115
    %158 = vmatprep.subr.bf16.mxu0 %v120
    %159 = vmatpush1.bf16.msra.mxu0 %v119
    %160 = vmatprep.subr.bf16.mxu0 0
    %161 = vmatpush1.bf16.msra.mxu0 0
    %162 = vmatprep.subr.bf16.mxu0 0
    %163 = vmatpush1.bf16.msra.mxu0 0
    %164 = vmatprep.subr.bf16.mxu0 0
    %165 = vmatpush1.bf16.msra.mxu0 0
    %166 = vmatprep.subr.bf16.mxu0 0
    %167 = vmatpush1.bf16.msra.mxu0 0
    %168 = vmatprep.subr.bf16.mxu0 0
    %169 = vmatpush1.bf16.msra.mxu0 0
    %170 = vmatprep.subr.bf16.mxu0 0
    %171 = vmatpush1.bf16.msra.mxu0 0
    %172 = vmatprep.subr.bf16.mxu0 0
    %173 = vmatpush1.bf16.msra.mxu0 0
    %174 = vmatprep.subr.bf16.mxu0 0
    %175 = vmatpush1.bf16.msra.mxu0 0
    %176 = vmatprep.subr.bf16.mxu0 0
    %177 = vmatpush1.bf16.msra.mxu0 0
    %178 = vmatprep.subr.bf16.mxu0 0
    %179 = vmatpush1.bf16.msra.mxu0 0
    %180 = vmatprep.subr.bf16.mxu0 0
    %181 = vmatpush1.bf16.msra.mxu0 0
    %182 = vmatprep.subr.bf16.mxu0 0
    %183 = vmatpush1.bf16.msra.mxu0 0
    %184 = vmatprep.subr.bf16.mxu0 0
    %185 = vmatpush1.bf16.msra.mxu0 0
    %186 = vmatprep.subr.bf16.mxu0 0
    %187 = vmatpush1.bf16.msra.mxu0 0
    %188 = vmatprep.mubr.bf16.mxu0 0
    %189 = vmatmul.mubr.bf16.gmra.mrb[0].mxu0 %v133
    %v190 = vpop.f32.mrb[0].mxu0
    %v191 = vadd.f32 0.0, %v190
    %v192 = vpop.f32.mrb[0].mxu0
    %v193 = vadd.f32 0.0, %v192
    %v194 = vpop.f32.mrb[0].mxu0
    %v195 = vadd.f32 0.0, %v194
    %v196 = vpop.f32.mrb[0].mxu0
    %v197 = vadd.f32 0.0, %v196
    %198 = vmatprep.mubr.bf16.mxu0 0
    %199 = vmatmul.mubr.bf16.gmra.mrb[0].mxu0 %v136
    %v200 = vpop.f32.mrb[0].mxu0
    %v201 = vadd.f32 0.0, %v200
    %v202 = vpop.f32.mrb[0].mxu0
    %v203 = vadd.f32 0.0, %v202
    %v204 = vpop.f32.mrb[0].mxu0
    %v205 = vadd.f32 0.0, %v204
    %v206 = vpop.f32.mrb[0].mxu0
    %v207 = vadd.f32 0.0, %v206
    %208 = vmatprep.mubr.bf16.mxu0 0
    %209 = vmatmul.mubr.bf16.gmra.mrb[0].mxu0 %v139
    %v210 = vpop.f32.mrb[0].mxu0
    %v211 = vadd.f32 0.0, %v210
    %v212 = vpop.f32.mrb[0].mxu0
    %v213 = vadd.f32 0.0, %v212
    %v214 = vpop.f32.mrb[0].mxu0
    %v215 = vadd.f32 0.0, %v214
    %v216 = vpop.f32.mrb[0].mxu0
    %v217 = vadd.f32 0.0, %v216
    %218 = vmatprep.mubr.bf16.mxu0 0
    %219 = vmatmul.mubr.bf16.gmra.mrb[0].mxu0 %v142
    %v220 = vpop.f32.mrb[0].mxu0
    %v221 = vadd.f32 0.0, %v220
    %v222 = vpop.f32.mrb[0].mxu0
    %v223 = vadd.f32 0.0, %v222
    %v224 = vpop.f32.mrb[0].mxu0
    %v225 = vadd.f32 0.0, %v224
    %v226 = vpop.f32.mrb[0].mxu0
    %v227 = vadd.f32 0.0, %v226
    %228 = vmatprep.mubr.bf16.mxu0 0
    %229 = vmatmul.mubr.bf16.gmra.mrb[0].mxu0 %v145
    %v230 = vpop.f32.mrb[0].mxu0
    %v231 = vadd.f32 0.0, %v230
    %v232 = vpop.f32.mrb[0].mxu0
    %v233 = vadd.f32 0.0, %v232
    %v234 = vpop.f32.mrb[0].mxu0
    %v235 = vadd.f32 0.0, %v234
    %v236 = vpop.f32.mrb[0].mxu0
    %v237 = vadd.f32 0.0, %v236
    %238 = vmatprep.mubr.bf16.mxu0 0
    %239 = vmatmul.mubr.bf16.gmra.mrb[0].mxu0 %v148
    %v240 = vpop.f32.mrb[0].mxu0
    %v241 = vadd.f32 0.0, %v240
    %v242 = vpop.f32.mrb[0].mxu0
    %v243 = vadd.f32 0.0, %v242
    %v244 = vpop.f32.mrb[0].mxu0
    %v245 = vadd.f32 0.0, %v244
    %v246 = vpop.f32.mrb[0].mxu0
    %v247 = vadd.f32 0.0, %v246
    %248 = vmatprep.mubr.bf16.mxu0 0
    %249 = vmatmul.mubr.bf16.gmra.mrb[0].mxu0 %v151
    %v250 = vpop.f32.mrb[0].mxu0
    %v251 = vadd.f32 0.0, %v250
    %v252 = vpop.f32.mrb[0].mxu0
    %v253 = vadd.f32 0.0, %v252
    %v254 = vpop.f32.mrb[0].mxu0
    %v255 = vadd.f32 0.0, %v254
    %v256 = vpop.f32.mrb[0].mxu0
    %v257 = vadd.f32 0.0, %v256
    %258 = vmatprep.mubr.bf16.mxu0 0
    %259 = vmatmul.mubr.bf16.gmra.mrb[0].mxu0 %v154
    %v260 = vpop.f32.mrb[0].mxu0
    %v261 = vadd.f32 0.0, %v260
    %v262 = vpop.f32.mrb[0].mxu0
    %v263 = vadd.f32 0.0, %v262
    %v264 = vpop.f32.mrb[0].mxu0
    %v265 = vadd.f32 0.0, %v264
    %v266 = vpop.f32.mrb[0].mxu0
    %v267 = vadd.f32 0.0, %v266
    %268 = vdwg.mxu0
    %269 = vmatprep.subr.bf16.mxu0 %v118
    %270 = vmatpush1.bf16.msra.mxu0 %v117
    %271 = vmatprep.subr.bf16.mxu0 %v122
    %272 = vmatpush1.bf16.msra.mxu0 %v121
    %273 = vmatprep.subr.bf16.mxu0 0
    %274 = vmatpush1.bf16.msra.mxu0 0
    %275 = vmatprep.subr.bf16.mxu0 0
    %276 = vmatpush1.bf16.msra.mxu0 0
    %277 = vmatprep.subr.bf16.mxu0 0
    %278 = vmatpush1.bf16.msra.mxu0 0
    %279 = vmatprep.subr.bf16.mxu0 0
    %280 = vmatpush1.bf16.msra.mxu0 0
    %281 = vmatprep.subr.bf16.mxu0 0
    %282 = vmatpush1.bf16.msra.mxu0 0
    %283 = vmatprep.subr.bf16.mxu0 0
    %284 = vmatpush1.bf16.msra.mxu0 0
    %285 = vmatprep.subr.bf16.mxu0 0
    %286 = vmatpush1.bf16.msra.mxu0 0
    %287 = vmatprep.subr.bf16.mxu0 0
    %288 = vmatpush1.bf16.msra.mxu0 0
    %289 = vmatprep.subr.bf16.mxu0 0
    %290 = vmatpush1.bf16.msra.mxu0 0
    %291 = vmatprep.subr.bf16.mxu0 0
    %292 = vmatpush1.bf16.msra.mxu0 0
    %293 = vmatprep.subr.bf16.mxu0 0
    %294 = vmatpush1.bf16.msra.mxu0 0
    %295 = vmatprep.subr.bf16.mxu0 0
    %296 = vmatpush1.bf16.msra.mxu0 0
    %297 = vmatprep.subr.bf16.mxu0 0
    %298 = vmatpush1.bf16.msra.mxu0 0
    %299 = vmatprep.subr.bf16.mxu0 0
    %300 = vmatpush1.bf16.msra.mxu0 0
    %301 = vmatprep.mubr.bf16.mxu0 0
    %302 = vmatmul.mubr.bf16.gmra.mrb[0].mxu0 %v133
    %v303 = vpop.f32.mrb[0].mxu0
    %v304 = vadd.f32 0.0, %v303
    %v305 = vpop.f32.mrb[0].mxu0
    %v306 = vadd.f32 0.0, %v305
    %v307 = vpop.f32.mrb[0].mxu0
    %v308 = vadd.f32 0.0, %v307
    %v309 = vpop.f32.mrb[0].mxu0
    %v310 = vadd.f32 0.0, %v309
    %311 = vmatprep.mubr.bf16.mxu0 0
    %312 = vmatmul.mubr.bf16.gmra.mrb[0].mxu0 %v136
    %v313 = vpop.f32.mrb[0].mxu0
    %v314 = vadd.f32 0.0, %v313
    %v315 = vpop.f32.mrb[0].mxu0
    %v316 = vadd.f32 0.0, %v315
    %v317 = vpop.f32.mrb[0].mxu0
    %v318 = vadd.f32 0.0, %v317
    %v319 = vpop.f32.mrb[0].mxu0
    %v320 = vadd.f32 0.0, %v319
    %321 = vmatprep.mubr.bf16.mxu0 0
    %322 = vmatmul.mubr.bf16.gmra.mrb[0].mxu0 %v139
    %v323 = vpop.f32.mrb[0].mxu0
    %v324 = vadd.f32 0.0, %v323
    %v325 = vpop.f32.mrb[0].mxu0
    %v326 = vadd.f32 0.0, %v325
    %v327 = vpop.f32.mrb[0].mxu0
    %v328 = vadd.f32 0.0, %v327
    %v329 = vpop.f32.mrb[0].mxu0
    %v330 = vadd.f32 0.0, %v329
    %331 = vmatprep.mubr.bf16.mxu0 0
    %332 = vmatmul.mubr.bf16.gmra.mrb[0].mxu0 %v142
    %v333 = vpop.f32.mrb[0].mxu0
    %v334 = vadd.f32 0.0, %v333
    %v335 = vpop.f32.mrb[0].mxu0
    %v336 = vadd.f32 0.0, %v335
    %v337 = vpop.f32.mrb[0].mxu0
    %v338 = vadd.f32 0.0, %v337
    %v339 = vpop.f32.mrb[0].mxu0
    %v340 = vadd.f32 0.0, %v339
    %341 = vmatprep.mubr.bf16.mxu0 0
    %342 = vmatmul.mubr.bf16.gmra.mrb[0].mxu0 %v145
    %v343 = vpop.f32.mrb[0].mxu0
    %v344 = vadd.f32 0.0, %v343
    %v345 = vpop.f32.mrb[0].mxu0
    %v346 = vadd.f32 0.0, %v345
    %v347 = vpop.f32.mrb[0].mxu0
    %v348 = vadd.f32 0.0, %v347
    %v349 = vpop.f32.mrb[0].mxu0
    %v350 = vadd.f32 0.0, %v349
    %351 = vmatprep.mubr.bf16.mxu0 0
    %352 = vmatmul.mubr.bf16.gmra.mrb[0].mxu0 %v148
    %v353 = vpop.f32.mrb[0].mxu0
    %v354 = vadd.f32 0.0, %v353
    %v355 = vpop.f32.mrb[0].mxu0
    %v356 = vadd.f32 0.0, %v355
    %v357 = vpop.f32.mrb[0].mxu0
    %v358 = vadd.f32 0.0, %v357
    %v359 = vpop.f32.mrb[0].mxu0
    %v360 = vadd.f32 0.0, %v359
    %361 = vmatprep.mubr.bf16.mxu0 0
    %362 = vmatmul.mubr.bf16.gmra.mrb[0].mxu0 %v151
    %v363 = vpop.f32.mrb[0].mxu0
    %v364 = vadd.f32 0.0, %v363
    %v365 = vpop.f32.mrb[0].mxu0
    %v366 = vadd.f32 0.0, %v365
    %v367 = vpop.f32.mrb[0].mxu0
    %v368 = vadd.f32 0.0, %v367
    %v369 = vpop.f32.mrb[0].mxu0
    %v370 = vadd.f32 0.0, %v369
    %371 = vmatprep.mubr.bf16.mxu0 0
    %372 = vmatmul.mubr.bf16.gmra.mrb[0].mxu0 %v154
    %v373 = vpop.f32.mrb[0].mxu0
    %v374 = vadd.f32 0.0, %v373
    %v375 = vpop.f32.mrb[0].mxu0
    %v376 = vadd.f32 0.0, %v375
    %v377 = vpop.f32.mrb[0].mxu0
    %v378 = vadd.f32 0.0, %v377
    %v379 = vpop.f32.mrb[0].mxu0
    %v380 = vadd.f32 0.0, %v379
    %381 = vdwg.mxu0
    %v382 = vpack.c.bf16 %v195, %v191
    %v383 = vpack.c.bf16 %v197, %v193
    %v384 = vpack.c.bf16 %v308, %v304
    %v385 = vpack.c.bf16 %v310, %v306
    %v386 = vpack.c.bf16 %v205, %v201
    %v387 = vpack.c.bf16 %v207, %v203
    %v388 = vpack.c.bf16 %v318, %v314
    %v389 = vpack.c.bf16 %v320, %v316
    %v390 = vpack.c.bf16 %v215, %v211
    %v391 = vpack.c.bf16 %v217, %v213
    %v392 = vpack.c.bf16 %v328, %v324
    %v393 = vpack.c.bf16 %v330, %v326
    %v394 = vpack.c.bf16 %v225, %v221
    %v395 = vpack.c.bf16 %v227, %v223
    %v396 = vpack.c.bf16 %v338, %v334
    %v397 = vpack.c.bf16 %v340, %v336
    %v398 = vpack.c.bf16 %v235, %v231
    %v399 = vpack.c.bf16 %v237, %v233
    %v400 = vpack.c.bf16 %v348, %v344
    %v401 = vpack.c.bf16 %v350, %v346
    %v402 = vpack.c.bf16 %v245, %v241
    %v403 = vpack.c.bf16 %v247, %v243
    %v404 = vpack.c.bf16 %v358, %v354
    %v405 = vpack.c.bf16 %v360, %v356
    %v406 = vpack.c.bf16 %v255, %v251
    %v407 = vpack.c.bf16 %v257, %v253
    %v408 = vpack.c.bf16 %v368, %v364
    %v409 = vpack.c.bf16 %v370, %v366
    %v410 = vpack.c.bf16 %v265, %v261
    %v411 = vpack.c.bf16 %v267, %v263
    %v412 = vpack.c.bf16 %v378, %v374
    %v413 = vpack.c.bf16 %v380, %v376
    %414 = vst [vmem:[#allocation2] sm:$0xff] %v382
    %415 = vst [vmem:[#allocation2 + $0x8] sm:$0xff] %v383
    %416 = vst [vmem:[#allocation2 + $0x10] sm:$0xff] %v384
    %417 = vst [vmem:[#allocation2 + $0x18] sm:$0xff] %v385
    %418 = vst [vmem:[#allocation2 + $0x20] sm:$0xff] %v386
    %419 = vst [vmem:[#allocation2 + $0x28] sm:$0xff] %v387
    %420 = vst [vmem:[#allocation2 + $0x30] sm:$0xff] %v388
    %421 = vst [vmem:[#allocation2 + $0x38] sm:$0xff] %v389
    %422 = vst [vmem:[#allocation2 + $0x40] sm:$0xff] %v390
    %423 = vst [vmem:[#allocation2 + $0x48] sm:$0xff] %v391
    %424 = vst [vmem:[#allocation2 + $0x50] sm:$0xff] %v392
    %425 = vst [vmem:[#allocation2 + $0x58] sm:$0xff] %v393
    %426 = vst [vmem:[#allocation2 + $0x60] sm:$0xff] %v394
    %427 = vst [vmem:[#allocation2 + $0x68] sm:$0xff] %v395
    %428 = vst [vmem:[#allocation2 + $0x70] sm:$0xff] %v396
    %429 = vst [vmem:[#allocation2 + $0x78] sm:$0xff] %v397
    %430 = vst [vmem:[#allocation2 + $0x80] sm:$0xff] %v398
    %431 = vst [vmem:[#allocation2 + $0x88] sm:$0xff] %v399
    %432 = vst [vmem:[#allocation2 + $0x90] sm:$0xff] %v400
    %433 = vst [vmem:[#allocation2 + $0x98] sm:$0xff] %v401
    %434 = vst [vmem:[#allocation2 + $0xa0] sm:$0xff] %v402
    %435 = vst [vmem:[#allocation2 + $0xa8] sm:$0xff] %v403
    %436 = vst [vmem:[#allocation2 + $0xb0] sm:$0xff] %v404
    %437 = vst [vmem:[#allocation2 + $0xb8] sm:$0xff] %v405
    %438 = vst [vmem:[#allocation2 + $0xc0] sm:$0xff] %v406
    %439 = vst [vmem:[#allocation2 + $0xc8] sm:$0xff] %v407
    %440 = vst [vmem:[#allocation2 + $0xd0] sm:$0xff] %v408
    %441 = vst [vmem:[#allocation2 + $0xd8] sm:$0xff] %v409
    %442 = vst [vmem:[#allocation2 + $0xe0] sm:$0xff] %v410
    %443 = vst [vmem:[#allocation2 + $0xe8] sm:$0xff] %v411
    %444 = vst [vmem:[#allocation2 + $0xf0] sm:$0xff] %v412
    %445 = vst [vmem:[#allocation2 + $0xf8] sm:$0xff] %v413
    %v446 = vld [vmem:[%s3] sm:$0xf]
    %v447 = vld [vmem:[#allocation3] sm:$0xff]
    %v448 = vld [vmem:[#allocation3 + $0x8] sm:$0xff]
    %v449 = vld [vmem:[#allocation4] sm:$0xff]
    %v450 = vld [vmem:[#allocation4 + $0x8] sm:$0xff]
    %s451 = smul.u32 0, 4
    %s452 = smul.addr %s451, 8
    %s453 = scalar_lea.vmem [#allocation2], %s452
    %v454 = vld [vmem:[%s453] sm:$0xff]
    %v455 = vld [vmem:[%s453 + $0x8] sm:$0xff]
    %v456 = vld [vmem:[%s453 + $0x10] sm:$0xff]
    %v457 = vld [vmem:[%s453 + $0x18] sm:$0xff]
    %v458 = vunpack.c.l.bf16 %v454
    %v459 = vunpack.c.l.bf16 %v455
    %v460 = vunpack.c.l.bf16 %v456
    %v461 = vunpack.c.l.bf16 %v457
    %v462 = vunpack.c.h.bf16 %v454
    %v463 = vunpack.c.h.bf16 %v455
    %v464 = vunpack.c.h.bf16 %v456
    %v465 = vunpack.c.h.bf16 %v457
    %v467 = vlaneseq
    %v468 = vshrl.u32 %v467, 7
    %v469 = vsub.s32 0, %v468
    %v470 = vrot.slane %v446, %v469
    %v471 = vlaneseq
    %v472 = vshrl.u32 %v471, 7
    %v473 = vsub.s32 1, %v472
    %v474 = vrot.slane %v446, %v473
    %v475 = vlaneseq
    %v476 = vshrl.u32 %v475, 7
    %v477 = vsub.s32 2, %v476
    %v478 = vrot.slane %v446, %v477
    %v479 = vlaneseq
    %v480 = vshrl.u32 %v479, 7
    %v481 = vsub.s32 3, %v480
    %v482 = vrot.slane %v446, %v481
    %v487 = vadd.f32 %v458, %v470
    %v488 = vadd.f32 %v459, %v474
    %v489 = vadd.f32 %v460, %v478
    %v490 = vadd.f32 %v461, %v482
    %v491 = vadd.f32 %v462, %v470
    %v492 = vadd.f32 %v463, %v474
    %v493 = vadd.f32 %v464, %v478
    %v494 = vadd.f32 %v465, %v482
    %v495 = vpack.c.bf16 %v448, %v447
    %v496 = vld [vmem:[%s2] sm:$0xff]
    %v497 = vld [vmem:[%s2 + $0x8] sm:$0xff]
    %v498 = vld [vmem:[%s2 + $0x10] sm:$0xff]
    %v499 = vld [vmem:[%s2 + $0x18] sm:$0xff]
    %v500 = vld [vmem:[%s2 + $0x20] sm:$0xff]
    %v501 = vld [vmem:[%s2 + $0x28] sm:$0xff]
    %v502 = vld [vmem:[%s2 + $0x30] sm:$0xff]
    %v503 = vld [vmem:[%s2 + $0x38] sm:$0xff]
    %v504 = vld [vmem:[%s2 + $0x40] sm:$0xff]
    %v505 = vld [vmem:[%s2 + $0x48] sm:$0xff]
    %v506 = vld [vmem:[%s2 + $0x50] sm:$0xff]
    %v507 = vld [vmem:[%s2 + $0x58] sm:$0xff]
    %v508 = vld [vmem:[%s2 + $0x60] sm:$0xff]
    %v509 = vld [vmem:[%s2 + $0x68] sm:$0xff]
    %v510 = vld [vmem:[%s2 + $0x70] sm:$0xff]
    %v511 = vld [vmem:[%s2 + $0x78] sm:$0xff]
    %v512 = vld [vmem:[%s2 + $0x80] sm:$0xff]
    %v513 = vld [vmem:[%s2 + $0x88] sm:$0xff]
    %v514 = vld [vmem:[%s2 + $0x90] sm:$0xff]
    %v515 = vld [vmem:[%s2 + $0x98] sm:$0xff]
    %v516 = vld [vmem:[%s2 + $0xa0] sm:$0xff]
    %v517 = vld [vmem:[%s2 + $0xa8] sm:$0xff]
    %v518 = vld [vmem:[%s2 + $0xb0] sm:$0xff]
    %v519 = vld [vmem:[%s2 + $0xb8] sm:$0xff]
    %v520 = vld [vmem:[%s2 + $0xc0] sm:$0xff]
    %v521 = vld [vmem:[%s2 + $0xc8] sm:$0xff]
    %v522 = vld [vmem:[%s2 + $0xd0] sm:$0xff]
    %v523 = vld [vmem:[%s2 + $0xd8] sm:$0xff]
    %v524 = vld [vmem:[%s2 + $0xe0] sm:$0xff]
    %v525 = vld [vmem:[%s2 + $0xe8] sm:$0xff]
    %v526 = vld [vmem:[%s2 + $0xf0] sm:$0xff]
    %v527 = vld [vmem:[%s2 + $0xf8] sm:$0xff]
    %v560 = vunpack.c.l.b16 %v496
    %v561 = vunpack.c.h.b16 %v496
    %v562 = vunpack.c.l.b16 %v497
    %v563 = vunpack.c.h.b16 %v497
    %v564 = vunpack.c.l.b16 %v498
    %v565 = vunpack.c.h.b16 %v498
    %v566 = vunpack.c.l.b16 %v499
    %v567 = vunpack.c.h.b16 %v499
    %v568 = vunpack.c.l.b16 %v500
    %v569 = vunpack.c.h.b16 %v500
    %v570 = vunpack.c.l.b16 %v501
    %v571 = vunpack.c.h.b16 %v501
    %v572 = vunpack.c.l.b16 %v502
    %v573 = vunpack.c.h.b16 %v502
    %v574 = vunpack.c.l.b16 %v503
    %v575 = vunpack.c.h.b16 %v503
    %v576 = vunpack.c.l.b16 %v504
    %v577 = vunpack.c.h.b16 %v504
    %v578 = vunpack.c.l.b16 %v505
    %v579 = vunpack.c.h.b16 %v505
    %v580 = vunpack.c.l.b16 %v506
    %v581 = vunpack.c.h.b16 %v506
    %v582 = vunpack.c.l.b16 %v507
    %v583 = vunpack.c.h.b16 %v507
    %v584 = vunpack.c.l.b16 %v508
    %v585 = vunpack.c.h.b16 %v508
    %v586 = vunpack.c.l.b16 %v509
    %v587 = vunpack.c.h.b16 %v509
    %v588 = vunpack.c.l.b16 %v510
    %v589 = vunpack.c.h.b16 %v510
    %v590 = vunpack.c.l.b16 %v511
    %v591 = vunpack.c.h.b16 %v511
    %v592 = vunpack.c.l.b16 %v512
    %v593 = vunpack.c.h.b16 %v512
    %v594 = vunpack.c.l.b16 %v513
    %v595 = vunpack.c.h.b16 %v513
    %v596 = vunpack.c.l.b16 %v514
    %v597 = vunpack.c.h.b16 %v514
    %v598 = vunpack.c.l.b16 %v515
    %v599 = vunpack.c.h.b16 %v515
    %v600 = vunpack.c.l.b16 %v516
    %v601 = vunpack.c.h.b16 %v516
    %v602 = vunpack.c.l.b16 %v517
    %v603 = vunpack.c.h.b16 %v517
    %v604 = vunpack.c.l.b16 %v518
    %v605 = vunpack.c.h.b16 %v518
    %v606 = vunpack.c.l.b16 %v519
    %v607 = vunpack.c.h.b16 %v519
    %v608 = vunpack.c.l.b16 %v520
    %v609 = vunpack.c.h.b16 %v520
    %v610 = vunpack.c.l.b16 %v521
    %v611 = vunpack.c.h.b16 %v521
    %v612 = vunpack.c.l.b16 %v522
    %v613 = vunpack.c.h.b16 %v522
    %v614 = vunpack.c.l.b16 %v523
    %v615 = vunpack.c.h.b16 %v523
    %v616 = vunpack.c.l.b16 %v524
    %v617 = vunpack.c.h.b16 %v524
    %v618 = vunpack.c.l.b16 %v525
    %v619 = vunpack.c.h.b16 %v525
    %v620 = vunpack.c.l.b16 %v526
    %v621 = vunpack.c.h.b16 %v526
    %v622 = vunpack.c.l.b16 %v527
    %v623 = vunpack.c.h.b16 %v527
    %v624 = vpack.c.b16 %v564, %v560
    %v625 = vpack.c.b16 %v565, %v561
    %v626 = vpack.c.b16 %v566, %v562
    %v627 = vpack.c.b16 %v567, %v563
    %v628 = vpack.c.b16 %v572, %v568
    %v629 = vpack.c.b16 %v573, %v569
    %v630 = vpack.c.b16 %v574, %v570
    %v631 = vpack.c.b16 %v575, %v571
    %v632 = vpack.c.b16 %v580, %v576
    %v633 = vpack.c.b16 %v581, %v577
    %v634 = vpack.c.b16 %v582, %v578
    %v635 = vpack.c.b16 %v583, %v579
    %v636 = vpack.c.b16 %v588, %v584
    %v637 = vpack.c.b16 %v589, %v585
    %v638 = vpack.c.b16 %v590, %v586
    %v639 = vpack.c.b16 %v591, %v587
    %v640 = vpack.c.b16 %v596, %v592
    %v641 = vpack.c.b16 %v597, %v593
    %v642 = vpack.c.b16 %v598, %v594
    %v643 = vpack.c.b16 %v599, %v595
    %v644 = vpack.c.b16 %v604, %v600
    %v645 = vpack.c.b16 %v605, %v601
    %v646 = vpack.c.b16 %v606, %v602
    %v647 = vpack.c.b16 %v607, %v603
    %v648 = vpack.c.b16 %v612, %v608
    %v649 = vpack.c.b16 %v613, %v609
    %v650 = vpack.c.b16 %v614, %v610
    %v651 = vpack.c.b16 %v615, %v611
    %v652 = vpack.c.b16 %v620, %v616
    %v653 = vpack.c.b16 %v621, %v617
    %v654 = vpack.c.b16 %v622, %v618
    %v655 = vpack.c.b16 %v623, %v619
    %688 = vmatprep.subr.bf16.mxu0 %v625
    %689 = vmatpush1.bf16.msra.mxu0 %v624
    %690 = vmatprep.subr.bf16.mxu0 %v629
    %691 = vmatpush1.bf16.msra.mxu0 %v628
    %692 = vmatprep.subr.bf16.mxu0 %v633
    %693 = vmatpush1.bf16.msra.mxu0 %v632
    %694 = vmatprep.subr.bf16.mxu0 %v637
    %695 = vmatpush1.bf16.msra.mxu0 %v636
    %696 = vmatprep.subr.bf16.mxu0 %v641
    %697 = vmatpush1.bf16.msra.mxu0 %v640
    %698 = vmatprep.subr.bf16.mxu0 %v645
    %699 = vmatpush1.bf16.msra.mxu0 %v644
    %700 = vmatprep.subr.bf16.mxu0 %v649
    %701 = vmatpush1.bf16.msra.mxu0 %v648
    %702 = vmatprep.subr.bf16.mxu0 %v653
    %703 = vmatpush1.bf16.msra.mxu0 %v652
    %704 = vmatprep.subr.bf16.mxu0 0
    %705 = vmatpush1.bf16.msra.mxu0 0
    %706 = vmatprep.subr.bf16.mxu0 0
    %707 = vmatpush1.bf16.msra.mxu0 0
    %708 = vmatprep.subr.bf16.mxu0 0
    %709 = vmatpush1.bf16.msra.mxu0 0
    %710 = vmatprep.subr.bf16.mxu0 0
    %711 = vmatpush1.bf16.msra.mxu0 0
    %712 = vmatprep.subr.bf16.mxu0 0
    %713 = vmatpush1.bf16.msra.mxu0 0
    %714 = vmatprep.subr.bf16.mxu0 0
    %715 = vmatpush1.bf16.msra.mxu0 0
    %716 = vmatprep.subr.bf16.mxu0 0
    %717 = vmatpush1.bf16.msra.mxu0 0
    %718 = vmatprep.subr.bf16.mxu0 0
    %719 = vmatpush1.bf16.msra.mxu0 0
    %720 = vmatprep.mubr.bf16.mxu0 0
    %721 = vmatmul.mubr.bf16.gmra.mrb[0].mxu0 %v495
    %v722 = vpop.f32.mrb[0].mxu0
    %v723 = vadd.f32 0.0, %v722
    %v724 = vpop.f32.mrb[0].mxu0
    %v725 = vadd.f32 0.0, %v724
    %v726 = vpop.f32.mrb[0].mxu0
    %v727 = vadd.f32 0.0, %v726
    %v728 = vpop.f32.mrb[0].mxu0
    %v729 = vadd.f32 0.0, %v728
    %730 = vdwg.mxu0
    %731 = vmatprep.subr.bf16.mxu0 %v627
    %732 = vmatpush1.bf16.msra.mxu0 %v626
    %733 = vmatprep.subr.bf16.mxu0 %v631
    %734 = vmatpush1.bf16.msra.mxu0 %v630
    %735 = vmatprep.subr.bf16.mxu0 %v635
    %736 = vmatpush1.bf16.msra.mxu0 %v634
    %737 = vmatprep.subr.bf16.mxu0 %v639
    %738 = vmatpush1.bf16.msra.mxu0 %v638
    %739 = vmatprep.subr.bf16.mxu0 %v643
    %740 = vmatpush1.bf16.msra.mxu0 %v642
    %741 = vmatprep.subr.bf16.mxu0 %v647
    %742 = vmatpush1.bf16.msra.mxu0 %v646
    %743 = vmatprep.subr.bf16.mxu0 %v651
    %744 = vmatpush1.bf16.msra.mxu0 %v650
    %745 = vmatprep.subr.bf16.mxu0 %v655
    %746 = vmatpush1.bf16.msra.mxu0 %v654
    %747 = vmatprep.subr.bf16.mxu0 0
    %748 = vmatpush1.bf16.msra.mxu0 0
    %749 = vmatprep.subr.bf16.mxu0 0
    %750 = vmatpush1.bf16.msra.mxu0 0
    %751 = vmatprep.subr.bf16.mxu0 0
    %752 = vmatpush1.bf16.msra.mxu0 0
    %753 = vmatprep.subr.bf16.mxu0 0
    %754 = vmatpush1.bf16.msra.mxu0 0
    %755 = vmatprep.subr.bf16.mxu0 0
    %756 = vmatpush1.bf16.msra.mxu0 0
    %757 = vmatprep.subr.bf16.mxu0 0
    %758 = vmatpush1.bf16.msra.mxu0 0
    %759 = vmatprep.subr.bf16.mxu0 0
    %760 = vmatpush1.bf16.msra.mxu0 0
    %761 = vmatprep.subr.bf16.mxu0 0
    %762 = vmatpush1.bf16.msra.mxu0 0
    %763 = vmatprep.mubr.bf16.mxu0 0
    %764 = vmatmul.mubr.bf16.gmra.mrb[0].mxu0 %v495
    %v765 = vpop.f32.mrb[0].mxu0
    %v766 = vadd.f32 0.0, %v765
    %v767 = vpop.f32.mrb[0].mxu0
    %v768 = vadd.f32 0.0, %v767
    %v769 = vpop.f32.mrb[0].mxu0
    %v770 = vadd.f32 0.0, %v769
    %v771 = vpop.f32.mrb[0].mxu0
    %v772 = vadd.f32 0.0, %v771
    %773 = vdwg.mxu0
    %v774 = vadd.f32 %v487, %v723
    %v775 = vadd.f32 %v488, %v725
    %v776 = vadd.f32 %v489, %v766
    %v777 = vadd.f32 %v490, %v768
    %v778 = vadd.f32 %v491, %v727
    %v779 = vadd.f32 %v492, %v729
    %v780 = vadd.f32 %v493, %v770
    %v781 = vadd.f32 %v494, %v772
    %v782 = vmul.f32 %v774, 0.5
    %v783 = vmul.f32 %v778, 0.5
    %v784 = vtanh.pop %v782
    %v785 = vtanh.pop %v783
    %v786 = vadd.f32 %v784, 1.0
    %v787 = vadd.f32 %v785, 1.0
    %v788 = vmul.f32 %v786, 0.5
    %v789 = vmul.f32 %v787, 0.5
    %v790 = vmul.f32 %v775, 0.5
    %v791 = vmul.f32 %v779, 0.5
    %v792 = vtanh.pop %v790
    %v793 = vtanh.pop %v791
    %v794 = vadd.f32 %v792, 1.0
    %v795 = vadd.f32 %v793, 1.0
    %v796 = vmul.f32 %v794, 0.5
    %v797 = vmul.f32 %v795, 0.5
    %v798 = vtanh.pop %v776
    %v799 = vtanh.pop %v780
    %v800 = vmul.f32 %v777, 0.5
    %v801 = vmul.f32 %v781, 0.5
    %v802 = vtanh.pop %v800
    %v803 = vtanh.pop %v801
    %v804 = vadd.f32 %v802, 1.0
    %v805 = vadd.f32 %v803, 1.0
    %v806 = vmul.f32 %v804, 0.5
    %v807 = vmul.f32 %v805, 0.5
    %v808 = vmul.f32 %v796, %v449
    %v809 = vmul.f32 %v797, %v450
    %v810 = vmul.f32 %v788, %v798
    %v811 = vmul.f32 %v789, %v799
    %v812 = vadd.f32 %v808, %v810
    %v813 = vadd.f32 %v809, %v811
    %v814 = vtanh.pop %v812
    %v815 = vtanh.pop %v813
    %v816 = vmul.f32 %v806, %v814
    %v817 = vmul.f32 %v807, %v815
    %s818 = smul.u32 1, 4
    %s819 = smul.addr %s818, 8
    %s820 = scalar_lea.vmem [#allocation2], %s819
    %v821 = vld [vmem:[%s820] sm:$0xff]
    %v822 = vld [vmem:[%s820 + $0x8] sm:$0xff]
    %v823 = vld [vmem:[%s820 + $0x10] sm:$0xff]
    %v824 = vld [vmem:[%s820 + $0x18] sm:$0xff]
    %v825 = vunpack.c.l.bf16 %v821
    %v826 = vunpack.c.l.bf16 %v822
    %v827 = vunpack.c.l.bf16 %v823
    %v828 = vunpack.c.l.bf16 %v824
    %v829 = vunpack.c.h.bf16 %v821
    %v830 = vunpack.c.h.bf16 %v822
    %v831 = vunpack.c.h.bf16 %v823
    %v832 = vunpack.c.h.bf16 %v824
    %v833 = vadd.f32 %v825, %v470
    %v834 = vadd.f32 %v826, %v474
    %v835 = vadd.f32 %v827, %v478
    %v836 = vadd.f32 %v828, %v482
    %v837 = vadd.f32 %v829, %v470
    %v838 = vadd.f32 %v830, %v474
    %v839 = vadd.f32 %v831, %v478
    %v840 = vadd.f32 %v832, %v482
    %v841 = vpack.c.bf16 %v817, %v816
    %842 = vmatprep.subr.bf16.mxu0 %v625
    %843 = vmatpush1.bf16.msra.mxu0 %v624
    %844 = vmatprep.subr.bf16.mxu0 %v629
    %845 = vmatpush1.bf16.msra.mxu0 %v628
    %846 = vmatprep.subr.bf16.mxu0 %v633
    %847 = vmatpush1.bf16.msra.mxu0 %v632
    %848 = vmatprep.subr.bf16.mxu0 %v637
    %849 = vmatpush1.bf16.msra.mxu0 %v636
    %850 = vmatprep.subr.bf16.mxu0 %v641
    %851 = vmatpush1.bf16.msra.mxu0 %v640
    %852 = vmatprep.subr.bf16.mxu0 %v645
    %853 = vmatpush1.bf16.msra.mxu0 %v644
    %854 = vmatprep.subr.bf16.mxu0 %v649
    %855 = vmatpush1.bf16.msra.mxu0 %v648
    %856 = vmatprep.subr.bf16.mxu0 %v653
    %857 = vmatpush1.bf16.msra.mxu0 %v652
    %858 = vmatprep.subr.bf16.mxu0 0
    %859 = vmatpush1.bf16.msra.mxu0 0
    %860 = vmatprep.subr.bf16.mxu0 0
    %861 = vmatpush1.bf16.msra.mxu0 0
    %862 = vmatprep.subr.bf16.mxu0 0
    %863 = vmatpush1.bf16.msra.mxu0 0
    %864 = vmatprep.subr.bf16.mxu0 0
    %865 = vmatpush1.bf16.msra.mxu0 0
    %866 = vmatprep.subr.bf16.mxu0 0
    %867 = vmatpush1.bf16.msra.mxu0 0
    %868 = vmatprep.subr.bf16.mxu0 0
    %869 = vmatpush1.bf16.msra.mxu0 0
    %870 = vmatprep.subr.bf16.mxu0 0
    %871 = vmatpush1.bf16.msra.mxu0 0
    %872 = vmatprep.subr.bf16.mxu0 0
    %873 = vmatpush1.bf16.msra.mxu0 0
    %874 = vmatprep.mubr.bf16.mxu0 0
    %875 = vmatmul.mubr.bf16.gmra.mrb[0].mxu0 %v841
    %v876 = vpop.f32.mrb[0].mxu0
    %v877 = vadd.f32 0.0, %v876
    %v878 = vpop.f32.mrb[0].mxu0
    %v879 = vadd.f32 0.0, %v878
    %v880 = vpop.f32.mrb[0].mxu0
    %v881 = vadd.f32 0.0, %v880
    %v882 = vpop.f32.mrb[0].mxu0
    %v883 = vadd.f32 0.0, %v882
    %884 = vdwg.mxu0
    %885 = vmatprep.subr.bf16.mxu0 %v627
    %886 = vmatpush1.bf16.msra.mxu0 %v626
    %887 = vmatprep.subr.bf16.mxu0 %v631
    %888 = vmatpush1.bf16.msra.mxu0 %v630
    %889 = vmatprep.subr.bf16.mxu0 %v635
    %890 = vmatpush1.bf16.msra.mxu0 %v634
    %891 = vmatprep.subr.bf16.mxu0 %v639
    %892 = vmatpush1.bf16.msra.mxu0 %v638
    %893 = vmatprep.subr.bf16.mxu0 %v643
    %894 = vmatpush1.bf16.msra.mxu0 %v642
    %895 = vmatprep.subr.bf16.mxu0 %v647
    %896 = vmatpush1.bf16.msra.mxu0 %v646
    %897 = vmatprep.subr.bf16.mxu0 %v651
    %898 = vmatpush1.bf16.msra.mxu0 %v650
    %899 = vmatprep.subr.bf16.mxu0 %v655
    %900 = vmatpush1.bf16.msra.mxu0 %v654
    %901 = vmatprep.subr.bf16.mxu0 0
    %902 = vmatpush1.bf16.msra.mxu0 0
    %903 = vmatprep.subr.bf16.mxu0 0
    %904 = vmatpush1.bf16.msra.mxu0 0
    %905 = vmatprep.subr.bf16.mxu0 0
    %906 = vmatpush1.bf16.msra.mxu0 0
    %907 = vmatprep.subr.bf16.mxu0 0
    %908 = vmatpush1.bf16.msra.mxu0 0
    %909 = vmatprep.subr.bf16.mxu0 0
    %910 = vmatpush1.bf16.msra.mxu0 0
    %911 = vmatprep.subr.bf16.mxu0 0
    %912 = vmatpush1.bf16.msra.mxu0 0
    %913 = vmatprep.subr.bf16.mxu0 0
    %914 = vmatpush1.bf16.msra.mxu0 0
    %915 = vmatprep.subr.bf16.mxu0 0
    %916 = vmatpush1.bf16.msra.mxu0 0
    %917 = vmatprep.mubr.bf16.mxu0 0
    %918 = vmatmul.mubr.bf16.gmra.mrb[0].mxu0 %v841
    %v919 = vpop.f32.mrb[0].mxu0
    %v920 = vadd.f32 0.0, %v919
    %v921 = vpop.f32.mrb[0].mxu0
    %v922 = vadd.f32 0.0, %v921
    %v923 = vpop.f32.mrb[0].mxu0
    %v924 = vadd.f32 0.0, %v923
    %v925 = vpop.f32.mrb[0].mxu0
    %v926 = vadd.f32 0.0, %v925
    %927 = vdwg.mxu0
    %v928 = vadd.f32 %v833, %v877
    %v929 = vadd.f32 %v834, %v879
    %v930 = vadd.f32 %v835, %v920
    %v931 = vadd.f32 %v836, %v922
    %v932 = vadd.f32 %v837, %v881
    %v933 = vadd.f32 %v838, %v883
    %v934 = vadd.f32 %v839, %v924
    %v935 = vadd.f32 %v840, %v926
    %v936 = vmul.f32 %v928, 0.5
    %v937 = vmul.f32 %v932, 0.5
    %v938 = vtanh.pop %v936
    %v939 = vtanh.pop %v937
    %v940 = vadd.f32 %v938, 1.0
    %v941 = vadd.f32 %v939, 1.0
    %v942 = vmul.f32 %v940, 0.5
    %v943 = vmul.f32 %v941, 0.5
    %v944 = vmul.f32 %v929, 0.5
    %v945 = vmul.f32 %v933, 0.5
    %v946 = vtanh.pop %v944
    %v947 = vtanh.pop %v945
    %v948 = vadd.f32 %v946, 1.0
    %v949 = vadd.f32 %v947, 1.0
    %v950 = vmul.f32 %v948, 0.5
    %v951 = vmul.f32 %v949, 0.5
    %v952 = vtanh.pop %v930
    %v953 = vtanh.pop %v934
    %v954 = vmul.f32 %v931, 0.5
    %v955 = vmul.f32 %v935, 0.5
    %v956 = vtanh.pop %v954
    %v957 = vtanh.pop %v955
    %v958 = vadd.f32 %v956, 1.0
    %v959 = vadd.f32 %v957, 1.0
    %v960 = vmul.f32 %v958, 0.5
    %v961 = vmul.f32 %v959, 0.5
    %v962 = vmul.f32 %v950, %v812
    %v963 = vmul.f32 %v951, %v813
    %v964 = vmul.f32 %v942, %v952
    %v965 = vmul.f32 %v943, %v953
    %v966 = vadd.f32 %v962, %v964
    %v967 = vadd.f32 %v963, %v965
    %v968 = vtanh.pop %v966
    %v969 = vtanh.pop %v967
    %v970 = vmul.f32 %v960, %v968
    %v971 = vmul.f32 %v961, %v969
    %s972 = smul.u32 2, 4
    %s973 = smul.addr %s972, 8
    %s974 = scalar_lea.vmem [#allocation2], %s973
    %v975 = vld [vmem:[%s974] sm:$0xff]
    %v976 = vld [vmem:[%s974 + $0x8] sm:$0xff]
    %v977 = vld [vmem:[%s974 + $0x10] sm:$0xff]
    %v978 = vld [vmem:[%s974 + $0x18] sm:$0xff]
    %v979 = vunpack.c.l.bf16 %v975
    %v980 = vunpack.c.l.bf16 %v976
    %v981 = vunpack.c.l.bf16 %v977
    %v982 = vunpack.c.l.bf16 %v978
    %v983 = vunpack.c.h.bf16 %v975
    %v984 = vunpack.c.h.bf16 %v976
    %v985 = vunpack.c.h.bf16 %v977
    %v986 = vunpack.c.h.bf16 %v978
    %v987 = vadd.f32 %v979, %v470
    %v988 = vadd.f32 %v980, %v474
    %v989 = vadd.f32 %v981, %v478
    %v990 = vadd.f32 %v982, %v482
    %v991 = vadd.f32 %v983, %v470
    %v992 = vadd.f32 %v984, %v474
    %v993 = vadd.f32 %v985, %v478
    %v994 = vadd.f32 %v986, %v482
    %v995 = vpack.c.bf16 %v971, %v970
    %996 = vmatprep.subr.bf16.mxu0 %v625
    %997 = vmatpush1.bf16.msra.mxu0 %v624
    %998 = vmatprep.subr.bf16.mxu0 %v629
    %999 = vmatpush1.bf16.msra.mxu0 %v628
    %1000 = vmatprep.subr.bf16.mxu0 %v633
    %1001 = vmatpush1.bf16.msra.mxu0 %v632
    %1002 = vmatprep.subr.bf16.mxu0 %v637
    %1003 = vmatpush1.bf16.msra.mxu0 %v636
    %1004 = vmatprep.subr.bf16.mxu0 %v641
    %1005 = vmatpush1.bf16.msra.mxu0 %v640
    %1006 = vmatprep.subr.bf16.mxu0 %v645
    %1007 = vmatpush1.bf16.msra.mxu0 %v644
    %1008 = vmatprep.subr.bf16.mxu0 %v649
    %1009 = vmatpush1.bf16.msra.mxu0 %v648
    %1010 = vmatprep.subr.bf16.mxu0 %v653
    %1011 = vmatpush1.bf16.msra.mxu0 %v652
    %1012 = vmatprep.subr.bf16.mxu0 0
    %1013 = vmatpush1.bf16.msra.mxu0 0
    %1014 = vmatprep.subr.bf16.mxu0 0
    %1015 = vmatpush1.bf16.msra.mxu0 0
    %1016 = vmatprep.subr.bf16.mxu0 0
    %1017 = vmatpush1.bf16.msra.mxu0 0
    %1018 = vmatprep.subr.bf16.mxu0 0
    %1019 = vmatpush1.bf16.msra.mxu0 0
    %1020 = vmatprep.subr.bf16.mxu0 0
    %1021 = vmatpush1.bf16.msra.mxu0 0
    %1022 = vmatprep.subr.bf16.mxu0 0
    %1023 = vmatpush1.bf16.msra.mxu0 0
    %1024 = vmatprep.subr.bf16.mxu0 0
    %1025 = vmatpush1.bf16.msra.mxu0 0
    %1026 = vmatprep.subr.bf16.mxu0 0
    %1027 = vmatpush1.bf16.msra.mxu0 0
    %1028 = vmatprep.mubr.bf16.mxu0 0
    %1029 = vmatmul.mubr.bf16.gmra.mrb[0].mxu0 %v995
    %v1030 = vpop.f32.mrb[0].mxu0
    %v1031 = vadd.f32 0.0, %v1030
    %v1032 = vpop.f32.mrb[0].mxu0
    %v1033 = vadd.f32 0.0, %v1032
    %v1034 = vpop.f32.mrb[0].mxu0
    %v1035 = vadd.f32 0.0, %v1034
    %v1036 = vpop.f32.mrb[0].mxu0
    %v1037 = vadd.f32 0.0, %v1036
    %1038 = vdwg.mxu0
    %1039 = vmatprep.subr.bf16.mxu0 %v627
    %1040 = vmatpush1.bf16.msra.mxu0 %v626
    %1041 = vmatprep.subr.bf16.mxu0 %v631
    %1042 = vmatpush1.bf16.msra.mxu0 %v630
    %1043 = vmatprep.subr.bf16.mxu0 %v635
    %1044 = vmatpush1.bf16.msra.mxu0 %v634
    %1045 = vmatprep.subr.bf16.mxu0 %v639
    %1046 = vmatpush1.bf16.msra.mxu0 %v638
    %1047 = vmatprep.subr.bf16.mxu0 %v643
    %1048 = vmatpush1.bf16.msra.mxu0 %v642
    %1049 = vmatprep.subr.bf16.mxu0 %v647
    %1050 = vmatpush1.bf16.msra.mxu0 %v646
    %1051 = vmatprep.subr.bf16.mxu0 %v651
    %1052 = vmatpush1.bf16.msra.mxu0 %v650
    %1053 = vmatprep.subr.bf16.mxu0 %v655
    %1054 = vmatpush1.bf16.msra.mxu0 %v654
    %1055 = vmatprep.subr.bf16.mxu0 0
    %1056 = vmatpush1.bf16.msra.mxu0 0
    %1057 = vmatprep.subr.bf16.mxu0 0
    %1058 = vmatpush1.bf16.msra.mxu0 0
    %1059 = vmatprep.subr.bf16.mxu0 0
    %1060 = vmatpush1.bf16.msra.mxu0 0
    %1061 = vmatprep.subr.bf16.mxu0 0
    %1062 = vmatpush1.bf16.msra.mxu0 0
    %1063 = vmatprep.subr.bf16.mxu0 0
    %1064 = vmatpush1.bf16.msra.mxu0 0
    %1065 = vmatprep.subr.bf16.mxu0 0
    %1066 = vmatpush1.bf16.msra.mxu0 0
    %1067 = vmatprep.subr.bf16.mxu0 0
    %1068 = vmatpush1.bf16.msra.mxu0 0
    %1069 = vmatprep.subr.bf16.mxu0 0
    %1070 = vmatpush1.bf16.msra.mxu0 0
    %1071 = vmatprep.mubr.bf16.mxu0 0
    %1072 = vmatmul.mubr.bf16.gmra.mrb[0].mxu0 %v995
    %v1073 = vpop.f32.mrb[0].mxu0
    %v1074 = vadd.f32 0.0, %v1073
    %v1075 = vpop.f32.mrb[0].mxu0
    %v1076 = vadd.f32 0.0, %v1075
    %v1077 = vpop.f32.mrb[0].mxu0
    %v1078 = vadd.f32 0.0, %v1077
    %v1079 = vpop.f32.mrb[0].mxu0
    %v1080 = vadd.f32 0.0, %v1079
    %1081 = vdwg.mxu0
    %v1082 = vadd.f32 %v987, %v1031
    %v1083 = vadd.f32 %v988, %v1033
    %v1084 = vadd.f32 %v989, %v1074
    %v1085 = vadd.f32 %v990, %v1076
    %v1086 = vadd.f32 %v991, %v1035
    %v1087 = vadd.f32 %v992, %v1037
    %v1088 = vadd.f32 %v993, %v1078
    %v1089 = vadd.f32 %v994, %v1080
    %v1090 = vmul.f32 %v1082, 0.5
    %v1091 = vmul.f32 %v1086, 0.5
    %v1092 = vtanh.pop %v1090
    %v1093 = vtanh.pop %v1091
    %v1094 = vadd.f32 %v1092, 1.0
    %v1095 = vadd.f32 %v1093, 1.0
    %v1096 = vmul.f32 %v1094, 0.5
    %v1097 = vmul.f32 %v1095, 0.5
    %v1098 = vmul.f32 %v1083, 0.5
    %v1099 = vmul.f32 %v1087, 0.5
    %v1100 = vtanh.pop %v1098
    %v1101 = vtanh.pop %v1099
    %v1102 = vadd.f32 %v1100, 1.0
    %v1103 = vadd.f32 %v1101, 1.0
    %v1104 = vmul.f32 %v1102, 0.5
    %v1105 = vmul.f32 %v1103, 0.5
    %v1106 = vtanh.pop %v1084
    %v1107 = vtanh.pop %v1088
    %v1108 = vmul.f32 %v1085, 0.5
    %v1109 = vmul.f32 %v1089, 0.5
    %v1110 = vtanh.pop %v1108
    %v1111 = vtanh.pop %v1109
    %v1112 = vadd.f32 %v1110, 1.0
    %v1113 = vadd.f32 %v1111, 1.0
    %v1114 = vmul.f32 %v1112, 0.5
    %v1115 = vmul.f32 %v1113, 0.5
    %v1116 = vmul.f32 %v1104, %v966
    %v1117 = vmul.f32 %v1105, %v967
    %v1118 = vmul.f32 %v1096, %v1106
    %v1119 = vmul.f32 %v1097, %v1107
    %v1120 = vadd.f32 %v1116, %v1118
    %v1121 = vadd.f32 %v1117, %v1119
    %v1122 = vtanh.pop %v1120
    %v1123 = vtanh.pop %v1121
    %v1124 = vmul.f32 %v1114, %v1122
    %v1125 = vmul.f32 %v1115, %v1123
    %s1126 = smul.u32 3, 4
    %s1127 = smul.addr %s1126, 8
    %s1128 = scalar_lea.vmem [#allocation2], %s1127
    %v1129 = vld [vmem:[%s1128] sm:$0xff]
    %v1130 = vld [vmem:[%s1128 + $0x8] sm:$0xff]
    %v1131 = vld [vmem:[%s1128 + $0x10] sm:$0xff]
    %v1132 = vld [vmem:[%s1128 + $0x18] sm:$0xff]
    %v1133 = vunpack.c.l.bf16 %v1129
    %v1134 = vunpack.c.l.bf16 %v1130
    %v1135 = vunpack.c.l.bf16 %v1131
    %v1136 = vunpack.c.l.bf16 %v1132
    %v1137 = vunpack.c.h.bf16 %v1129
    %v1138 = vunpack.c.h.bf16 %v1130
    %v1139 = vunpack.c.h.bf16 %v1131
    %v1140 = vunpack.c.h.bf16 %v1132
    %v1141 = vadd.f32 %v1133, %v470
    %v1142 = vadd.f32 %v1134, %v474
    %v1143 = vadd.f32 %v1135, %v478
    %v1144 = vadd.f32 %v1136, %v482
    %v1145 = vadd.f32 %v1137, %v470
    %v1146 = vadd.f32 %v1138, %v474
    %v1147 = vadd.f32 %v1139, %v478
    %v1148 = vadd.f32 %v1140, %v482
    %v1149 = vpack.c.bf16 %v1125, %v1124
    %1150 = vmatprep.subr.bf16.mxu0 %v625
    %1151 = vmatpush1.bf16.msra.mxu0 %v624
    %1152 = vmatprep.subr.bf16.mxu0 %v629
    %1153 = vmatpush1.bf16.msra.mxu0 %v628
    %1154 = vmatprep.subr.bf16.mxu0 %v633
    %1155 = vmatpush1.bf16.msra.mxu0 %v632
    %1156 = vmatprep.subr.bf16.mxu0 %v637
    %1157 = vmatpush1.bf16.msra.mxu0 %v636
    %1158 = vmatprep.subr.bf16.mxu0 %v641
    %1159 = vmatpush1.bf16.msra.mxu0 %v640
    %1160 = vmatprep.subr.bf16.mxu0 %v645
    %1161 = vmatpush1.bf16.msra.mxu0 %v644
    %1162 = vmatprep.subr.bf16.mxu0 %v649
    %1163 = vmatpush1.bf16.msra.mxu0 %v648
    %1164 = vmatprep.subr.bf16.mxu0 %v653
    %1165 = vmatpush1.bf16.msra.mxu0 %v652
    %1166 = vmatprep.subr.bf16.mxu0 0
    %1167 = vmatpush1.bf16.msra.mxu0 0
    %1168 = vmatprep.subr.bf16.mxu0 0
    %1169 = vmatpush1.bf16.msra.mxu0 0
    %1170 = vmatprep.subr.bf16.mxu0 0
    %1171 = vmatpush1.bf16.msra.mxu0 0
    %1172 = vmatprep.subr.bf16.mxu0 0
    %1173 = vmatpush1.bf16.msra.mxu0 0
    %1174 = vmatprep.subr.bf16.mxu0 0
    %1175 = vmatpush1.bf16.msra.mxu0 0
    %1176 = vmatprep.subr.bf16.mxu0 0
    %1177 = vmatpush1.bf16.msra.mxu0 0
    %1178 = vmatprep.subr.bf16.mxu0 0
    %1179 = vmatpush1.bf16.msra.mxu0 0
    %1180 = vmatprep.subr.bf16.mxu0 0
    %1181 = vmatpush1.bf16.msra.mxu0 0
    %1182 = vmatprep.mubr.bf16.mxu0 0
    %1183 = vmatmul.mubr.bf16.gmra.mrb[0].mxu0 %v1149
    %v1184 = vpop.f32.mrb[0].mxu0
    %v1185 = vadd.f32 0.0, %v1184
    %v1186 = vpop.f32.mrb[0].mxu0
    %v1187 = vadd.f32 0.0, %v1186
    %v1188 = vpop.f32.mrb[0].mxu0
    %v1189 = vadd.f32 0.0, %v1188
    %v1190 = vpop.f32.mrb[0].mxu0
    %v1191 = vadd.f32 0.0, %v1190
    %1192 = vdwg.mxu0
    %1193 = vmatprep.subr.bf16.mxu0 %v627
    %1194 = vmatpush1.bf16.msra.mxu0 %v626
    %1195 = vmatprep.subr.bf16.mxu0 %v631
    %1196 = vmatpush1.bf16.msra.mxu0 %v630
    %1197 = vmatprep.subr.bf16.mxu0 %v635
    %1198 = vmatpush1.bf16.msra.mxu0 %v634
    %1199 = vmatprep.subr.bf16.mxu0 %v639
    %1200 = vmatpush1.bf16.msra.mxu0 %v638
    %1201 = vmatprep.subr.bf16.mxu0 %v643
    %1202 = vmatpush1.bf16.msra.mxu0 %v642
    %1203 = vmatprep.subr.bf16.mxu0 %v647
    %1204 = vmatpush1.bf16.msra.mxu0 %v646
    %1205 = vmatprep.subr.bf16.mxu0 %v651
    %1206 = vmatpush1.bf16.msra.mxu0 %v650
    %1207 = vmatprep.subr.bf16.mxu0 %v655
    %1208 = vmatpush1.bf16.msra.mxu0 %v654
    %1209 = vmatprep.subr.bf16.mxu0 0
    %1210 = vmatpush1.bf16.msra.mxu0 0
    %1211 = vmatprep.subr.bf16.mxu0 0
    %1212 = vmatpush1.bf16.msra.mxu0 0
    %1213 = vmatprep.subr.bf16.mxu0 0
    %1214 = vmatpush1.bf16.msra.mxu0 0
    %1215 = vmatprep.subr.bf16.mxu0 0
    %1216 = vmatpush1.bf16.msra.mxu0 0
    %1217 = vmatprep.subr.bf16.mxu0 0
    %1218 = vmatpush1.bf16.msra.mxu0 0
    %1219 = vmatprep.subr.bf16.mxu0 0
    %1220 = vmatpush1.bf16.msra.mxu0 0
    %1221 = vmatprep.subr.bf16.mxu0 0
    %1222 = vmatpush1.bf16.msra.mxu0 0
    %1223 = vmatprep.subr.bf16.mxu0 0
    %1224 = vmatpush1.bf16.msra.mxu0 0
    %1225 = vmatprep.mubr.bf16.mxu0 0
    %1226 = vmatmul.mubr.bf16.gmra.mrb[0].mxu0 %v1149
    %v1227 = vpop.f32.mrb[0].mxu0
    %v1228 = vadd.f32 0.0, %v1227
    %v1229 = vpop.f32.mrb[0].mxu0
    %v1230 = vadd.f32 0.0, %v1229
    %v1231 = vpop.f32.mrb[0].mxu0
    %v1232 = vadd.f32 0.0, %v1231
    %v1233 = vpop.f32.mrb[0].mxu0
    %v1234 = vadd.f32 0.0, %v1233
    %1235 = vdwg.mxu0
    %v1236 = vadd.f32 %v1141, %v1185
    %v1237 = vadd.f32 %v1142, %v1187
    %v1238 = vadd.f32 %v1143, %v1228
    %v1239 = vadd.f32 %v1144, %v1230
    %v1240 = vadd.f32 %v1145, %v1189
    %v1241 = vadd.f32 %v1146, %v1191
    %v1242 = vadd.f32 %v1147, %v1232
    %v1243 = vadd.f32 %v1148, %v1234
    %v1244 = vmul.f32 %v1236, 0.5
    %v1245 = vmul.f32 %v1240, 0.5
    %v1246 = vtanh.pop %v1244
    %v1247 = vtanh.pop %v1245
    %v1248 = vadd.f32 %v1246, 1.0
    %v1249 = vadd.f32 %v1247, 1.0
    %v1250 = vmul.f32 %v1248, 0.5
    %v1251 = vmul.f32 %v1249, 0.5
    %v1252 = vmul.f32 %v1237, 0.5
    %v1253 = vmul.f32 %v1241, 0.5
    %v1254 = vtanh.pop %v1252
    %v1255 = vtanh.pop %v1253
    %v1256 = vadd.f32 %v1254, 1.0
    %v1257 = vadd.f32 %v1255, 1.0
    %v1258 = vmul.f32 %v1256, 0.5
    %v1259 = vmul.f32 %v1257, 0.5
    %v1260 = vtanh.pop %v1238
    %v1261 = vtanh.pop %v1242
    %v1262 = vmul.f32 %v1239, 0.5
    %v1263 = vmul.f32 %v1243, 0.5
    %v1264 = vtanh.pop %v1262
    %v1265 = vtanh.pop %v1263
    %v1266 = vadd.f32 %v1264, 1.0
    %v1267 = vadd.f32 %v1265, 1.0
    %v1268 = vmul.f32 %v1266, 0.5
    %v1269 = vmul.f32 %v1267, 0.5
    %v1270 = vmul.f32 %v1258, %v1120
    %v1271 = vmul.f32 %v1259, %v1121
    %v1272 = vmul.f32 %v1250, %v1260
    %v1273 = vmul.f32 %v1251, %v1261
    %v1274 = vadd.f32 %v1270, %v1272
    %v1275 = vadd.f32 %v1271, %v1273
    %v1276 = vtanh.pop %v1274
    %v1277 = vtanh.pop %v1275
    %v1278 = vmul.f32 %v1268, %v1276
    %v1279 = vmul.f32 %v1269, %v1277
    %s1280 = smul.u32 4, 4
    %s1281 = smul.addr %s1280, 8
    %s1282 = scalar_lea.vmem [#allocation2], %s1281
    %v1283 = vld [vmem:[%s1282] sm:$0xff]
    %v1284 = vld [vmem:[%s1282 + $0x8] sm:$0xff]
    %v1285 = vld [vmem:[%s1282 + $0x10] sm:$0xff]
    %v1286 = vld [vmem:[%s1282 + $0x18] sm:$0xff]
    %v1287 = vunpack.c.l.bf16 %v1283
    %v1288 = vunpack.c.l.bf16 %v1284
    %v1289 = vunpack.c.l.bf16 %v1285
    %v1290 = vunpack.c.l.bf16 %v1286
    %v1291 = vunpack.c.h.bf16 %v1283
    %v1292 = vunpack.c.h.bf16 %v1284
    %v1293 = vunpack.c.h.bf16 %v1285
    %v1294 = vunpack.c.h.bf16 %v1286
    %v1295 = vadd.f32 %v1287, %v470
    %v1296 = vadd.f32 %v1288, %v474
    %v1297 = vadd.f32 %v1289, %v478
    %v1298 = vadd.f32 %v1290, %v482
    %v1299 = vadd.f32 %v1291, %v470
    %v1300 = vadd.f32 %v1292, %v474
    %v1301 = vadd.f32 %v1293, %v478
    %v1302 = vadd.f32 %v1294, %v482
    %v1303 = vpack.c.bf16 %v1279, %v1278
    %1304 = vmatprep.subr.bf16.mxu0 %v625
    %1305 = vmatpush1.bf16.msra.mxu0 %v624
    %1306 = vmatprep.subr.bf16.mxu0 %v629
    %1307 = vmatpush1.bf16.msra.mxu0 %v628
    %1308 = vmatprep.subr.bf16.mxu0 %v633
    %1309 = vmatpush1.bf16.msra.mxu0 %v632
    %1310 = vmatprep.subr.bf16.mxu0 %v637
    %1311 = vmatpush1.bf16.msra.mxu0 %v636
    %1312 = vmatprep.subr.bf16.mxu0 %v641
    %1313 = vmatpush1.bf16.msra.mxu0 %v640
    %1314 = vmatprep.subr.bf16.mxu0 %v645
    %1315 = vmatpush1.bf16.msra.mxu0 %v644
    %1316 = vmatprep.subr.bf16.mxu0 %v649
    %1317 = vmatpush1.bf16.msra.mxu0 %v648
    %1318 = vmatprep.subr.bf16.mxu0 %v653
    %1319 = vmatpush1.bf16.msra.mxu0 %v652
    %1320 = vmatprep.subr.bf16.mxu0 0
    %1321 = vmatpush1.bf16.msra.mxu0 0
    %1322 = vmatprep.subr.bf16.mxu0 0
    %1323 = vmatpush1.bf16.msra.mxu0 0
    %1324 = vmatprep.subr.bf16.mxu0 0
    %1325 = vmatpush1.bf16.msra.mxu0 0
    %1326 = vmatprep.subr.bf16.mxu0 0
    %1327 = vmatpush1.bf16.msra.mxu0 0
    %1328 = vmatprep.subr.bf16.mxu0 0
    %1329 = vmatpush1.bf16.msra.mxu0 0
    %1330 = vmatprep.subr.bf16.mxu0 0
    %1331 = vmatpush1.bf16.msra.mxu0 0
    %1332 = vmatprep.subr.bf16.mxu0 0
    %1333 = vmatpush1.bf16.msra.mxu0 0
    %1334 = vmatprep.subr.bf16.mxu0 0
    %1335 = vmatpush1.bf16.msra.mxu0 0
    %1336 = vmatprep.mubr.bf16.mxu0 0
    %1337 = vmatmul.mubr.bf16.gmra.mrb[0].mxu0 %v1303
    %v1338 = vpop.f32.mrb[0].mxu0
    %v1339 = vadd.f32 0.0, %v1338
    %v1340 = vpop.f32.mrb[0].mxu0
    %v1341 = vadd.f32 0.0, %v1340
    %v1342 = vpop.f32.mrb[0].mxu0
    %v1343 = vadd.f32 0.0, %v1342
    %v1344 = vpop.f32.mrb[0].mxu0
    %v1345 = vadd.f32 0.0, %v1344
    %1346 = vdwg.mxu0
    %1347 = vmatprep.subr.bf16.mxu0 %v627
    %1348 = vmatpush1.bf16.msra.mxu0 %v626
    %1349 = vmatprep.subr.bf16.mxu0 %v631
    %1350 = vmatpush1.bf16.msra.mxu0 %v630
    %1351 = vmatprep.subr.bf16.mxu0 %v635
    %1352 = vmatpush1.bf16.msra.mxu0 %v634
    %1353 = vmatprep.subr.bf16.mxu0 %v639
    %1354 = vmatpush1.bf16.msra.mxu0 %v638
    %1355 = vmatprep.subr.bf16.mxu0 %v643
    %1356 = vmatpush1.bf16.msra.mxu0 %v642
    %1357 = vmatprep.subr.bf16.mxu0 %v647
    %1358 = vmatpush1.bf16.msra.mxu0 %v646
    %1359 = vmatprep.subr.bf16.mxu0 %v651
    %1360 = vmatpush1.bf16.msra.mxu0 %v650
    %1361 = vmatprep.subr.bf16.mxu0 %v655
    %1362 = vmatpush1.bf16.msra.mxu0 %v654
    %1363 = vmatprep.subr.bf16.mxu0 0
    %1364 = vmatpush1.bf16.msra.mxu0 0
    %1365 = vmatprep.subr.bf16.mxu0 0
    %1366 = vmatpush1.bf16.msra.mxu0 0
    %1367 = vmatprep.subr.bf16.mxu0 0
    %1368 = vmatpush1.bf16.msra.mxu0 0
    %1369 = vmatprep.subr.bf16.mxu0 0
    %1370 = vmatpush1.bf16.msra.mxu0 0
    %1371 = vmatprep.subr.bf16.mxu0 0
    %1372 = vmatpush1.bf16.msra.mxu0 0
    %1373 = vmatprep.subr.bf16.mxu0 0
    %1374 = vmatpush1.bf16.msra.mxu0 0
    %1375 = vmatprep.subr.bf16.mxu0 0
    %1376 = vmatpush1.bf16.msra.mxu0 0
    %1377 = vmatprep.subr.bf16.mxu0 0
    %1378 = vmatpush1.bf16.msra.mxu0 0
    %1379 = vmatprep.mubr.bf16.mxu0 0
    %1380 = vmatmul.mubr.bf16.gmra.mrb[0].mxu0 %v1303
    %v1381 = vpop.f32.mrb[0].mxu0
    %v1382 = vadd.f32 0.0, %v1381
    %v1383 = vpop.f32.mrb[0].mxu0
    %v1384 = vadd.f32 0.0, %v1383
    %v1385 = vpop.f32.mrb[0].mxu0
    %v1386 = vadd.f32 0.0, %v1385
    %v1387 = vpop.f32.mrb[0].mxu0
    %v1388 = vadd.f32 0.0, %v1387
    %1389 = vdwg.mxu0
    %v1390 = vadd.f32 %v1295, %v1339
    %v1391 = vadd.f32 %v1296, %v1341
    %v1392 = vadd.f32 %v1297, %v1382
    %v1393 = vadd.f32 %v1298, %v1384
    %v1394 = vadd.f32 %v1299, %v1343
    %v1395 = vadd.f32 %v1300, %v1345
    %v1396 = vadd.f32 %v1301, %v1386
    %v1397 = vadd.f32 %v1302, %v1388
    %v1398 = vmul.f32 %v1390, 0.5
    %v1399 = vmul.f32 %v1394, 0.5
    %v1400 = vtanh.pop %v1398
    %v1401 = vtanh.pop %v1399
    %v1402 = vadd.f32 %v1400, 1.0
    %v1403 = vadd.f32 %v1401, 1.0
    %v1404 = vmul.f32 %v1402, 0.5
    %v1405 = vmul.f32 %v1403, 0.5
    %v1406 = vmul.f32 %v1391, 0.5
    %v1407 = vmul.f32 %v1395, 0.5
    %v1408 = vtanh.pop %v1406
    %v1409 = vtanh.pop %v1407
    %v1410 = vadd.f32 %v1408, 1.0
    %v1411 = vadd.f32 %v1409, 1.0
    %v1412 = vmul.f32 %v1410, 0.5
    %v1413 = vmul.f32 %v1411, 0.5
    %v1414 = vtanh.pop %v1392
    %v1415 = vtanh.pop %v1396
    %v1416 = vmul.f32 %v1393, 0.5
    %v1417 = vmul.f32 %v1397, 0.5
    %v1418 = vtanh.pop %v1416
    %v1419 = vtanh.pop %v1417
    %v1420 = vadd.f32 %v1418, 1.0
    %v1421 = vadd.f32 %v1419, 1.0
    %v1422 = vmul.f32 %v1420, 0.5
    %v1423 = vmul.f32 %v1421, 0.5
    %v1424 = vmul.f32 %v1412, %v1274
    %v1425 = vmul.f32 %v1413, %v1275
    %v1426 = vmul.f32 %v1404, %v1414
    %v1427 = vmul.f32 %v1405, %v1415
    %v1428 = vadd.f32 %v1424, %v1426
    %v1429 = vadd.f32 %v1425, %v1427
    %v1430 = vtanh.pop %v1428
    %v1431 = vtanh.pop %v1429
    %v1432 = vmul.f32 %v1422, %v1430
    %v1433 = vmul.f32 %v1423, %v1431
    %s1434 = smul.u32 5, 4
    %s1435 = smul.addr %s1434, 8
    %s1436 = scalar_lea.vmem [#allocation2], %s1435
    %v1437 = vld [vmem:[%s1436] sm:$0xff]
    %v1438 = vld [vmem:[%s1436 + $0x8] sm:$0xff]
    %v1439 = vld [vmem:[%s1436 + $0x10] sm:$0xff]
    %v1440 = vld [vmem:[%s1436 + $0x18] sm:$0xff]
    %v1441 = vunpack.c.l.bf16 %v1437
    %v1442 = vunpack.c.l.bf16 %v1438
    %v1443 = vunpack.c.l.bf16 %v1439
    %v1444 = vunpack.c.l.bf16 %v1440
    %v1445 = vunpack.c.h.bf16 %v1437
    %v1446 = vunpack.c.h.bf16 %v1438
    %v1447 = vunpack.c.h.bf16 %v1439
    %v1448 = vunpack.c.h.bf16 %v1440
    %v1449 = vadd.f32 %v1441, %v470
    %v1450 = vadd.f32 %v1442, %v474
    %v1451 = vadd.f32 %v1443, %v478
    %v1452 = vadd.f32 %v1444, %v482
    %v1453 = vadd.f32 %v1445, %v470
    %v1454 = vadd.f32 %v1446, %v474
    %v1455 = vadd.f32 %v1447, %v478
    %v1456 = vadd.f32 %v1448, %v482
    %v1457 = vpack.c.bf16 %v1433, %v1432
    %1458 = vmatprep.subr.bf16.mxu0 %v625
    %1459 = vmatpush1.bf16.msra.mxu0 %v624
    %1460 = vmatprep.subr.bf16.mxu0 %v629
    %1461 = vmatpush1.bf16.msra.mxu0 %v628
    %1462 = vmatprep.subr.bf16.mxu0 %v633
    %1463 = vmatpush1.bf16.msra.mxu0 %v632
    %1464 = vmatprep.subr.bf16.mxu0 %v637
    %1465 = vmatpush1.bf16.msra.mxu0 %v636
    %1466 = vmatprep.subr.bf16.mxu0 %v641
    %1467 = vmatpush1.bf16.msra.mxu0 %v640
    %1468 = vmatprep.subr.bf16.mxu0 %v645
    %1469 = vmatpush1.bf16.msra.mxu0 %v644
    %1470 = vmatprep.subr.bf16.mxu0 %v649
    %1471 = vmatpush1.bf16.msra.mxu0 %v648
    %1472 = vmatprep.subr.bf16.mxu0 %v653
    %1473 = vmatpush1.bf16.msra.mxu0 %v652
    %1474 = vmatprep.subr.bf16.mxu0 0
    %1475 = vmatpush1.bf16.msra.mxu0 0
    %1476 = vmatprep.subr.bf16.mxu0 0
    %1477 = vmatpush1.bf16.msra.mxu0 0
    %1478 = vmatprep.subr.bf16.mxu0 0
    %1479 = vmatpush1.bf16.msra.mxu0 0
    %1480 = vmatprep.subr.bf16.mxu0 0
    %1481 = vmatpush1.bf16.msra.mxu0 0
    %1482 = vmatprep.subr.bf16.mxu0 0
    %1483 = vmatpush1.bf16.msra.mxu0 0
    %1484 = vmatprep.subr.bf16.mxu0 0
    %1485 = vmatpush1.bf16.msra.mxu0 0
    %1486 = vmatprep.subr.bf16.mxu0 0
    %1487 = vmatpush1.bf16.msra.mxu0 0
    %1488 = vmatprep.subr.bf16.mxu0 0
    %1489 = vmatpush1.bf16.msra.mxu0 0
    %1490 = vmatprep.mubr.bf16.mxu0 0
    %1491 = vmatmul.mubr.bf16.gmra.mrb[0].mxu0 %v1457
    %v1492 = vpop.f32.mrb[0].mxu0
    %v1493 = vadd.f32 0.0, %v1492
    %v1494 = vpop.f32.mrb[0].mxu0
    %v1495 = vadd.f32 0.0, %v1494
    %v1496 = vpop.f32.mrb[0].mxu0
    %v1497 = vadd.f32 0.0, %v1496
    %v1498 = vpop.f32.mrb[0].mxu0
    %v1499 = vadd.f32 0.0, %v1498
    %1500 = vdwg.mxu0
    %1501 = vmatprep.subr.bf16.mxu0 %v627
    %1502 = vmatpush1.bf16.msra.mxu0 %v626
    %1503 = vmatprep.subr.bf16.mxu0 %v631
    %1504 = vmatpush1.bf16.msra.mxu0 %v630
    %1505 = vmatprep.subr.bf16.mxu0 %v635
    %1506 = vmatpush1.bf16.msra.mxu0 %v634
    %1507 = vmatprep.subr.bf16.mxu0 %v639
    %1508 = vmatpush1.bf16.msra.mxu0 %v638
    %1509 = vmatprep.subr.bf16.mxu0 %v643
    %1510 = vmatpush1.bf16.msra.mxu0 %v642
    %1511 = vmatprep.subr.bf16.mxu0 %v647
    %1512 = vmatpush1.bf16.msra.mxu0 %v646
    %1513 = vmatprep.subr.bf16.mxu0 %v651
    %1514 = vmatpush1.bf16.msra.mxu0 %v650
    %1515 = vmatprep.subr.bf16.mxu0 %v655
    %1516 = vmatpush1.bf16.msra.mxu0 %v654
    %1517 = vmatprep.subr.bf16.mxu0 0
    %1518 = vmatpush1.bf16.msra.mxu0 0
    %1519 = vmatprep.subr.bf16.mxu0 0
    %1520 = vmatpush1.bf16.msra.mxu0 0
    %1521 = vmatprep.subr.bf16.mxu0 0
    %1522 = vmatpush1.bf16.msra.mxu0 0
    %1523 = vmatprep.subr.bf16.mxu0 0
    %1524 = vmatpush1.bf16.msra.mxu0 0
    %1525 = vmatprep.subr.bf16.mxu0 0
    %1526 = vmatpush1.bf16.msra.mxu0 0
    %1527 = vmatprep.subr.bf16.mxu0 0
    %1528 = vmatpush1.bf16.msra.mxu0 0
    %1529 = vmatprep.subr.bf16.mxu0 0
    %1530 = vmatpush1.bf16.msra.mxu0 0
    %1531 = vmatprep.subr.bf16.mxu0 0
    %1532 = vmatpush1.bf16.msra.mxu0 0
    %1533 = vmatprep.mubr.bf16.mxu0 0
    %1534 = vmatmul.mubr.bf16.gmra.mrb[0].mxu0 %v1457
    %v1535 = vpop.f32.mrb[0].mxu0
    %v1536 = vadd.f32 0.0, %v1535
    %v1537 = vpop.f32.mrb[0].mxu0
    %v1538 = vadd.f32 0.0, %v1537
    %v1539 = vpop.f32.mrb[0].mxu0
    %v1540 = vadd.f32 0.0, %v1539
    %v1541 = vpop.f32.mrb[0].mxu0
    %v1542 = vadd.f32 0.0, %v1541
    %1543 = vdwg.mxu0
    %v1544 = vadd.f32 %v1449, %v1493
    %v1545 = vadd.f32 %v1450, %v1495
    %v1546 = vadd.f32 %v1451, %v1536
    %v1547 = vadd.f32 %v1452, %v1538
    %v1548 = vadd.f32 %v1453, %v1497
    %v1549 = vadd.f32 %v1454, %v1499
    %v1550 = vadd.f32 %v1455, %v1540
    %v1551 = vadd.f32 %v1456, %v1542
    %v1552 = vmul.f32 %v1544, 0.5
    %v1553 = vmul.f32 %v1548, 0.5
    %v1554 = vtanh.pop %v1552
    %v1555 = vtanh.pop %v1553
    %v1556 = vadd.f32 %v1554, 1.0
    %v1557 = vadd.f32 %v1555, 1.0
    %v1558 = vmul.f32 %v1556, 0.5
    %v1559 = vmul.f32 %v1557, 0.5
    %v1560 = vmul.f32 %v1545, 0.5
    %v1561 = vmul.f32 %v1549, 0.5
    %v1562 = vtanh.pop %v1560
    %v1563 = vtanh.pop %v1561
    %v1564 = vadd.f32 %v1562, 1.0
    %v1565 = vadd.f32 %v1563, 1.0
    %v1566 = vmul.f32 %v1564, 0.5
    %v1567 = vmul.f32 %v1565, 0.5
    %v1568 = vtanh.pop %v1546
    %v1569 = vtanh.pop %v1550
    %v1570 = vmul.f32 %v1547, 0.5
    %v1571 = vmul.f32 %v1551, 0.5
    %v1572 = vtanh.pop %v1570
    %v1573 = vtanh.pop %v1571
    %v1574 = vadd.f32 %v1572, 1.0
    %v1575 = vadd.f32 %v1573, 1.0
    %v1576 = vmul.f32 %v1574, 0.5
    %v1577 = vmul.f32 %v1575, 0.5
    %v1578 = vmul.f32 %v1566, %v1428
    %v1579 = vmul.f32 %v1567, %v1429
    %v1580 = vmul.f32 %v1558, %v1568
    %v1581 = vmul.f32 %v1559, %v1569
    %v1582 = vadd.f32 %v1578, %v1580
    %v1583 = vadd.f32 %v1579, %v1581
    %v1584 = vtanh.pop %v1582
    %v1585 = vtanh.pop %v1583
    %v1586 = vmul.f32 %v1576, %v1584
    %v1587 = vmul.f32 %v1577, %v1585
    %s1588 = smul.u32 6, 4
    %s1589 = smul.addr %s1588, 8
    %s1590 = scalar_lea.vmem [#allocation2], %s1589
    %v1591 = vld [vmem:[%s1590] sm:$0xff]
    %v1592 = vld [vmem:[%s1590 + $0x8] sm:$0xff]
    %v1593 = vld [vmem:[%s1590 + $0x10] sm:$0xff]
    %v1594 = vld [vmem:[%s1590 + $0x18] sm:$0xff]
    %v1595 = vunpack.c.l.bf16 %v1591
    %v1596 = vunpack.c.l.bf16 %v1592
    %v1597 = vunpack.c.l.bf16 %v1593
    %v1598 = vunpack.c.l.bf16 %v1594
    %v1599 = vunpack.c.h.bf16 %v1591
    %v1600 = vunpack.c.h.bf16 %v1592
    %v1601 = vunpack.c.h.bf16 %v1593
    %v1602 = vunpack.c.h.bf16 %v1594
    %v1603 = vadd.f32 %v1595, %v470
    %v1604 = vadd.f32 %v1596, %v474
    %v1605 = vadd.f32 %v1597, %v478
    %v1606 = vadd.f32 %v1598, %v482
    %v1607 = vadd.f32 %v1599, %v470
    %v1608 = vadd.f32 %v1600, %v474
    %v1609 = vadd.f32 %v1601, %v478
    %v1610 = vadd.f32 %v1602, %v482
    %v1611 = vpack.c.bf16 %v1587, %v1586
    %1612 = vmatprep.subr.bf16.mxu0 %v625
    %1613 = vmatpush1.bf16.msra.mxu0 %v624
    %1614 = vmatprep.subr.bf16.mxu0 %v629
    %1615 = vmatpush1.bf16.msra.mxu0 %v628
    %1616 = vmatprep.subr.bf16.mxu0 %v633
    %1617 = vmatpush1.bf16.msra.mxu0 %v632
    %1618 = vmatprep.subr.bf16.mxu0 %v637
    %1619 = vmatpush1.bf16.msra.mxu0 %v636
    %1620 = vmatprep.subr.bf16.mxu0 %v641
    %1621 = vmatpush1.bf16.msra.mxu0 %v640
    %1622 = vmatprep.subr.bf16.mxu0 %v645
    %1623 = vmatpush1.bf16.msra.mxu0 %v644
    %1624 = vmatprep.subr.bf16.mxu0 %v649
    %1625 = vmatpush1.bf16.msra.mxu0 %v648
    %1626 = vmatprep.subr.bf16.mxu0 %v653
    %1627 = vmatpush1.bf16.msra.mxu0 %v652
    %1628 = vmatprep.subr.bf16.mxu0 0
    %1629 = vmatpush1.bf16.msra.mxu0 0
    %1630 = vmatprep.subr.bf16.mxu0 0
    %1631 = vmatpush1.bf16.msra.mxu0 0
    %1632 = vmatprep.subr.bf16.mxu0 0
    %1633 = vmatpush1.bf16.msra.mxu0 0
    %1634 = vmatprep.subr.bf16.mxu0 0
    %1635 = vmatpush1.bf16.msra.mxu0 0
    %1636 = vmatprep.subr.bf16.mxu0 0
    %1637 = vmatpush1.bf16.msra.mxu0 0
    %1638 = vmatprep.subr.bf16.mxu0 0
    %1639 = vmatpush1.bf16.msra.mxu0 0
    %1640 = vmatprep.subr.bf16.mxu0 0
    %1641 = vmatpush1.bf16.msra.mxu0 0
    %1642 = vmatprep.subr.bf16.mxu0 0
    %1643 = vmatpush1.bf16.msra.mxu0 0
    %1644 = vmatprep.mubr.bf16.mxu0 0
    %1645 = vmatmul.mubr.bf16.gmra.mrb[0].mxu0 %v1611
    %v1646 = vpop.f32.mrb[0].mxu0
    %v1647 = vadd.f32 0.0, %v1646
    %v1648 = vpop.f32.mrb[0].mxu0
    %v1649 = vadd.f32 0.0, %v1648
    %v1650 = vpop.f32.mrb[0].mxu0
    %v1651 = vadd.f32 0.0, %v1650
    %v1652 = vpop.f32.mrb[0].mxu0
    %v1653 = vadd.f32 0.0, %v1652
    %1654 = vdwg.mxu0
    %1655 = vmatprep.subr.bf16.mxu0 %v627
    %1656 = vmatpush1.bf16.msra.mxu0 %v626
    %1657 = vmatprep.subr.bf16.mxu0 %v631
    %1658 = vmatpush1.bf16.msra.mxu0 %v630
    %1659 = vmatprep.subr.bf16.mxu0 %v635
    %1660 = vmatpush1.bf16.msra.mxu0 %v634
    %1661 = vmatprep.subr.bf16.mxu0 %v639
    %1662 = vmatpush1.bf16.msra.mxu0 %v638
    %1663 = vmatprep.subr.bf16.mxu0 %v643
    %1664 = vmatpush1.bf16.msra.mxu0 %v642
    %1665 = vmatprep.subr.bf16.mxu0 %v647
    %1666 = vmatpush1.bf16.msra.mxu0 %v646
    %1667 = vmatprep.subr.bf16.mxu0 %v651
    %1668 = vmatpush1.bf16.msra.mxu0 %v650
    %1669 = vmatprep.subr.bf16.mxu0 %v655
    %1670 = vmatpush1.bf16.msra.mxu0 %v654
    %1671 = vmatprep.subr.bf16.mxu0 0
    %1672 = vmatpush1.bf16.msra.mxu0 0
    %1673 = vmatprep.subr.bf16.mxu0 0
    %1674 = vmatpush1.bf16.msra.mxu0 0
    %1675 = vmatprep.subr.bf16.mxu0 0
    %1676 = vmatpush1.bf16.msra.mxu0 0
    %1677 = vmatprep.subr.bf16.mxu0 0
    %1678 = vmatpush1.bf16.msra.mxu0 0
    %1679 = vmatprep.subr.bf16.mxu0 0
    %1680 = vmatpush1.bf16.msra.mxu0 0
    %1681 = vmatprep.subr.bf16.mxu0 0
    %1682 = vmatpush1.bf16.msra.mxu0 0
    %1683 = vmatprep.subr.bf16.mxu0 0
    %1684 = vmatpush1.bf16.msra.mxu0 0
    %1685 = vmatprep.subr.bf16.mxu0 0
    %1686 = vmatpush1.bf16.msra.mxu0 0
    %1687 = vmatprep.mubr.bf16.mxu0 0
    %1688 = vmatmul.mubr.bf16.gmra.mrb[0].mxu0 %v1611
    %v1689 = vpop.f32.mrb[0].mxu0
    %v1690 = vadd.f32 0.0, %v1689
    %v1691 = vpop.f32.mrb[0].mxu0
    %v1692 = vadd.f32 0.0, %v1691
    %v1693 = vpop.f32.mrb[0].mxu0
    %v1694 = vadd.f32 0.0, %v1693
    %v1695 = vpop.f32.mrb[0].mxu0
    %v1696 = vadd.f32 0.0, %v1695
    %1697 = vdwg.mxu0
    %v1698 = vadd.f32 %v1603, %v1647
    %v1699 = vadd.f32 %v1604, %v1649
    %v1700 = vadd.f32 %v1605, %v1690
    %v1701 = vadd.f32 %v1606, %v1692
    %v1702 = vadd.f32 %v1607, %v1651
    %v1703 = vadd.f32 %v1608, %v1653
    %v1704 = vadd.f32 %v1609, %v1694
    %v1705 = vadd.f32 %v1610, %v1696
    %v1706 = vmul.f32 %v1698, 0.5
    %v1707 = vmul.f32 %v1702, 0.5
    %v1708 = vtanh.pop %v1706
    %v1709 = vtanh.pop %v1707
    %v1710 = vadd.f32 %v1708, 1.0
    %v1711 = vadd.f32 %v1709, 1.0
    %v1712 = vmul.f32 %v1710, 0.5
    %v1713 = vmul.f32 %v1711, 0.5
    %v1714 = vmul.f32 %v1699, 0.5
    %v1715 = vmul.f32 %v1703, 0.5
    %v1716 = vtanh.pop %v1714
    %v1717 = vtanh.pop %v1715
    %v1718 = vadd.f32 %v1716, 1.0
    %v1719 = vadd.f32 %v1717, 1.0
    %v1720 = vmul.f32 %v1718, 0.5
    %v1721 = vmul.f32 %v1719, 0.5
    %v1722 = vtanh.pop %v1700
    %v1723 = vtanh.pop %v1704
    %v1724 = vmul.f32 %v1701, 0.5
    %v1725 = vmul.f32 %v1705, 0.5
    %v1726 = vtanh.pop %v1724
    %v1727 = vtanh.pop %v1725
    %v1728 = vadd.f32 %v1726, 1.0
    %v1729 = vadd.f32 %v1727, 1.0
    %v1730 = vmul.f32 %v1728, 0.5
    %v1731 = vmul.f32 %v1729, 0.5
    %v1732 = vmul.f32 %v1720, %v1582
    %v1733 = vmul.f32 %v1721, %v1583
    %v1734 = vmul.f32 %v1712, %v1722
    %v1735 = vmul.f32 %v1713, %v1723
    %v1736 = vadd.f32 %v1732, %v1734
    %v1737 = vadd.f32 %v1733, %v1735
    %v1738 = vtanh.pop %v1736
    %v1739 = vtanh.pop %v1737
    %v1740 = vmul.f32 %v1730, %v1738
    %v1741 = vmul.f32 %v1731, %v1739
    %s1742 = smul.u32 7, 4
    %s1743 = smul.addr %s1742, 8
    %s1744 = scalar_lea.vmem [#allocation2], %s1743
    %v1745 = vld [vmem:[%s1744] sm:$0xff]
    %v1746 = vld [vmem:[%s1744 + $0x8] sm:$0xff]
    %v1747 = vld [vmem:[%s1744 + $0x10] sm:$0xff]
    %v1748 = vld [vmem:[%s1744 + $0x18] sm:$0xff]
    %v1749 = vunpack.c.l.bf16 %v1745
    %v1750 = vunpack.c.l.bf16 %v1746
    %v1751 = vunpack.c.l.bf16 %v1747
    %v1752 = vunpack.c.l.bf16 %v1748
    %v1753 = vunpack.c.h.bf16 %v1745
    %v1754 = vunpack.c.h.bf16 %v1746
    %v1755 = vunpack.c.h.bf16 %v1747
    %v1756 = vunpack.c.h.bf16 %v1748
    %v1757 = vadd.f32 %v1749, %v470
    %v1758 = vadd.f32 %v1750, %v474
    %v1759 = vadd.f32 %v1751, %v478
    %v1760 = vadd.f32 %v1752, %v482
    %v1761 = vadd.f32 %v1753, %v470
    %v1762 = vadd.f32 %v1754, %v474
    %v1763 = vadd.f32 %v1755, %v478
    %v1764 = vadd.f32 %v1756, %v482
    %v1765 = vpack.c.bf16 %v1741, %v1740
    %1766 = vmatprep.subr.bf16.mxu0 %v625
    %1767 = vmatpush1.bf16.msra.mxu0 %v624
    %1768 = vmatprep.subr.bf16.mxu0 %v629
    %1769 = vmatpush1.bf16.msra.mxu0 %v628
    %1770 = vmatprep.subr.bf16.mxu0 %v633
    %1771 = vmatpush1.bf16.msra.mxu0 %v632
    %1772 = vmatprep.subr.bf16.mxu0 %v637
    %1773 = vmatpush1.bf16.msra.mxu0 %v636
    %1774 = vmatprep.subr.bf16.mxu0 %v641
    %1775 = vmatpush1.bf16.msra.mxu0 %v640
    %1776 = vmatprep.subr.bf16.mxu0 %v645
    %1777 = vmatpush1.bf16.msra.mxu0 %v644
    %1778 = vmatprep.subr.bf16.mxu0 %v649
    %1779 = vmatpush1.bf16.msra.mxu0 %v648
    %1780 = vmatprep.subr.bf16.mxu0 %v653
    %1781 = vmatpush1.bf16.msra.mxu0 %v652
    %1782 = vmatprep.subr.bf16.mxu0 0
    %1783 = vmatpush1.bf16.msra.mxu0 0
    %1784 = vmatprep.subr.bf16.mxu0 0
    %1785 = vmatpush1.bf16.msra.mxu0 0
    %1786 = vmatprep.subr.bf16.mxu0 0
    %1787 = vmatpush1.bf16.msra.mxu0 0
    %1788 = vmatprep.subr.bf16.mxu0 0
    %1789 = vmatpush1.bf16.msra.mxu0 0
    %1790 = vmatprep.subr.bf16.mxu0 0
    %1791 = vmatpush1.bf16.msra.mxu0 0
    %1792 = vmatprep.subr.bf16.mxu0 0
    %1793 = vmatpush1.bf16.msra.mxu0 0
    %1794 = vmatprep.subr.bf16.mxu0 0
    %1795 = vmatpush1.bf16.msra.mxu0 0
    %1796 = vmatprep.subr.bf16.mxu0 0
    %1797 = vmatpush1.bf16.msra.mxu0 0
    %1798 = vmatprep.mubr.bf16.mxu0 0
    %1799 = vmatmul.mubr.bf16.gmra.mrb[0].mxu0 %v1765
    %v1800 = vpop.f32.mrb[0].mxu0
    %v1801 = vadd.f32 0.0, %v1800
    %v1802 = vpop.f32.mrb[0].mxu0
    %v1803 = vadd.f32 0.0, %v1802
    %v1804 = vpop.f32.mrb[0].mxu0
    %v1805 = vadd.f32 0.0, %v1804
    %v1806 = vpop.f32.mrb[0].mxu0
    %v1807 = vadd.f32 0.0, %v1806
    %1808 = vdwg.mxu0
    %1809 = vmatprep.subr.bf16.mxu0 %v627
    %1810 = vmatpush1.bf16.msra.mxu0 %v626
    %1811 = vmatprep.subr.bf16.mxu0 %v631
    %1812 = vmatpush1.bf16.msra.mxu0 %v630
    %1813 = vmatprep.subr.bf16.mxu0 %v635
    %1814 = vmatpush1.bf16.msra.mxu0 %v634
    %1815 = vmatprep.subr.bf16.mxu0 %v639
    %1816 = vmatpush1.bf16.msra.mxu0 %v638
    %1817 = vmatprep.subr.bf16.mxu0 %v643
    %1818 = vmatpush1.bf16.msra.mxu0 %v642
    %1819 = vmatprep.subr.bf16.mxu0 %v647
    %1820 = vmatpush1.bf16.msra.mxu0 %v646
    %1821 = vmatprep.subr.bf16.mxu0 %v651
    %1822 = vmatpush1.bf16.msra.mxu0 %v650
    %1823 = vmatprep.subr.bf16.mxu0 %v655
    %1824 = vmatpush1.bf16.msra.mxu0 %v654
    %1825 = vmatprep.subr.bf16.mxu0 0
    %1826 = vmatpush1.bf16.msra.mxu0 0
    %1827 = vmatprep.subr.bf16.mxu0 0
    %1828 = vmatpush1.bf16.msra.mxu0 0
    %1829 = vmatprep.subr.bf16.mxu0 0
    %1830 = vmatpush1.bf16.msra.mxu0 0
    %1831 = vmatprep.subr.bf16.mxu0 0
    %1832 = vmatpush1.bf16.msra.mxu0 0
    %1833 = vmatprep.subr.bf16.mxu0 0
    %1834 = vmatpush1.bf16.msra.mxu0 0
    %1835 = vmatprep.subr.bf16.mxu0 0
    %1836 = vmatpush1.bf16.msra.mxu0 0
    %1837 = vmatprep.subr.bf16.mxu0 0
    %1838 = vmatpush1.bf16.msra.mxu0 0
    %1839 = vmatprep.subr.bf16.mxu0 0
    %1840 = vmatpush1.bf16.msra.mxu0 0
    %1841 = vmatprep.mubr.bf16.mxu0 0
    %1842 = vmatmul.mubr.bf16.gmra.mrb[0].mxu0 %v1765
    %v1843 = vpop.f32.mrb[0].mxu0
    %v1844 = vadd.f32 0.0, %v1843
    %v1845 = vpop.f32.mrb[0].mxu0
    %v1846 = vadd.f32 0.0, %v1845
    %v1847 = vpop.f32.mrb[0].mxu0
    %v1848 = vadd.f32 0.0, %v1847
    %v1849 = vpop.f32.mrb[0].mxu0
    %v1850 = vadd.f32 0.0, %v1849
    %1851 = vdwg.mxu0
    %v1852 = vadd.f32 %v1757, %v1801
    %v1853 = vadd.f32 %v1758, %v1803
    %v1854 = vadd.f32 %v1759, %v1844
    %v1855 = vadd.f32 %v1760, %v1846
    %v1856 = vadd.f32 %v1761, %v1805
    %v1857 = vadd.f32 %v1762, %v1807
    %v1858 = vadd.f32 %v1763, %v1848
    %v1859 = vadd.f32 %v1764, %v1850
    %v1860 = vmul.f32 %v1852, 0.5
    %v1861 = vmul.f32 %v1856, 0.5
    %v1862 = vtanh.pop %v1860
    %v1863 = vtanh.pop %v1861
    %v1864 = vadd.f32 %v1862, 1.0
    %v1865 = vadd.f32 %v1863, 1.0
    %v1866 = vmul.f32 %v1864, 0.5
    %v1867 = vmul.f32 %v1865, 0.5
    %v1868 = vmul.f32 %v1853, 0.5
    %v1869 = vmul.f32 %v1857, 0.5
    %v1870 = vtanh.pop %v1868
    %v1871 = vtanh.pop %v1869
    %v1872 = vadd.f32 %v1870, 1.0
    %v1873 = vadd.f32 %v1871, 1.0
    %v1874 = vmul.f32 %v1872, 0.5
    %v1875 = vmul.f32 %v1873, 0.5
    %v1876 = vtanh.pop %v1854
    %v1877 = vtanh.pop %v1858
    %v1878 = vmul.f32 %v1855, 0.5
    %v1879 = vmul.f32 %v1859, 0.5
    %v1880 = vtanh.pop %v1878
    %v1881 = vtanh.pop %v1879
    %v1882 = vadd.f32 %v1880, 1.0
    %v1883 = vadd.f32 %v1881, 1.0
    %v1884 = vmul.f32 %v1882, 0.5
    %v1885 = vmul.f32 %v1883, 0.5
    %v1886 = vmul.f32 %v1874, %v1736
    %v1887 = vmul.f32 %v1875, %v1737
    %v1888 = vmul.f32 %v1866, %v1876
    %v1889 = vmul.f32 %v1867, %v1877
    %v1890 = vadd.f32 %v1886, %v1888
    %v1891 = vadd.f32 %v1887, %v1889
    %v1892 = vtanh.pop %v1890
    %v1893 = vtanh.pop %v1891
    %v1894 = vmul.f32 %v1884, %v1892
    %v1895 = vmul.f32 %v1885, %v1893
    %1896 = vst [vmem:[#allocation3] sm:$0xff] %v1894
    %1897 = vst [vmem:[#allocation3 + $0x8] sm:$0xff] %v1895
    %1898 = vst [vmem:[#allocation4] sm:$0xff] %v1890
    %1899 = vst [vmem:[#allocation4 + $0x8] sm:$0xff] %v1891
    // Predicated region
    $region22: #{malstm_forward.1} parent=1 // pred_check
      %p1900 = pneg %p19
    $region23: #{malstm_forward.1} parent=1 // pred_check_branch
      %1902 = sbr.rel (%p1900) target = $region25
    $region24: #{malstm_forward.1} parent=1 // pred_region
      %v1903 = vsub.f32 %v1894, %v1895
      %v1904 = vand.u32 2147483647, %v1903
      %1905 = vadd.xlane.f32.xlu0 %v1904
      %v1906 = vpop.xlane.xlu0 %1905
      %v1907 = vsub.f32 0.0, %v1906
      %v1908 = vmul.f32 %v1907, 1.442695
      %v1909 = vpow.pop %v1908
      %v1911 = vlaneseq
      %v1912 = vand.u32 %v1911, 127
      %v1913 = vlaneseq
      %v1914 = vshrl.u32 %v1913, 7
      %v1915 = vsub.s32 %v1912, %v1914
      %v1916 = vrot.slane %v1909, %v1915
      %vm1918 = vcmask 57344
      %1919 = vst.msk [vmem:[#allocation5] sm:$0x1] %vm1918, %v1916
    $region25: #{malstm_forward.1} parent=1 // pred_fallthru
      _
    // Predicated region
    $region26: #{malstm_forward.1} parent=1 // pred_check
      _
    $region27: #{malstm_forward.1} parent=1 // pred_check_branch
      %1921 = sbr.rel (0) target = $region29
    $region28: #{malstm_forward.1} parent=1 // pred_region
      %s1923 = ssub.s32 16, 16
      %1924 = vsyncadd [#allocation6], %s1923
      %s1926 = sshll.u32 [#allocation5], 4
      %s1927 = int_to_ptr.vmem [resolvable:$true] %s1926
      %1929 = dma.vmem_to_hbm [thread:$0]  %s1927, 16, %s4, [#allocation6]
    $region29: #{malstm_forward.1} parent=1 // pred_fallthru
      _
    // Predicated region
    $region30: #{malstm_forward.1} parent=1 // pred_check
      _
    $region31: #{malstm_forward.1} parent=1 // pred_check_branch
      %1931 = sbr.rel (0) target = $region33
    $region32: #{malstm_forward.1} parent=1 // pred_region
      %1932 = dma.done [#allocation6], 16
    $region33: #{malstm_forward.1} parent=1 // pred_fallthru
      _
    %1933 = vsyncpa [#allocation6], 1

</llo_original>
